<compile_context>
chip_gen: v7x
topology: tpu7x:2x2x1
jax: 0.10.0
libtpu: 0.0.40
codegen_flags: <defaults>
</compile_context>

<pallas_src>
import functools

import jax
import jax.numpy as jnp
from jax.experimental import pallas as pl
from jax.experimental.pallas import tpu as pltpu


# ---------------------------------------------------------------------------
# Pallas kernel: LSTM recurrence, one grid step per (batch block, time chunk).
# ---------------------------------------------------------------------------
def _lstm_chunk_kernel(gx_ref, whh_ref, out_ref, c_out_ref, h_scr, c_scr,
                       *, hidden_dim, t_valid, unroll):
    """gx_ref   : (Bt, Tc, 4H) f32  precomputed x@W_ih + (b_ih+b_hh), batch-first,
                                    gate columns permuted to [i, f, o, g].
       whh_ref  : (H, 4H)      bf16 recurrent weight (pre-transposed, permuted).
       out_ref  : (Bt, Tc, H)  f32  per-step hidden outputs (batch-first).
       c_out_ref: (Bt, H)      f32  final cell state (written on last chunk).
       h_scr,c_scr: (Bt, H)    f32  state carried across time chunks."""
    chunk = pl.program_id(1)
    H = hidden_dim
    t_chunk = gx_ref.shape[1]

    @pl.when(chunk == 0)
    def _():
        h_scr[...] = jnp.zeros_like(h_scr)
        c_scr[...] = jnp.zeros_like(c_scr)

    # Static flag: only the padded tail (if T was padded up to a chunk
    # multiple) needs state-update masking.
    needs_mask = (t_valid % t_chunk) != 0

    def step(t, carry):
        h, c = carry
        # Serial critical path: recurrent matmul (bf16 operands, f32 acc)
        # plus the gate elementwise math.
        gates = gx_ref[:, t, :] + jnp.dot(
            h.astype(jnp.bfloat16), whh_ref[...],
            preferred_element_type=jnp.float32)

        # Gate order [i | f | o | g]: two lane-contiguous EUP launches.
        sig = jax.nn.sigmoid(gates[:, :3 * H])
        g_g = jnp.tanh(gates[:, 3 * H:])
        i_g = sig[:, 0 * H:1 * H]
        f_g = sig[:, 1 * H:2 * H]
        o_g = sig[:, 2 * H:3 * H]

        c_new = f_g * c + i_g * g_g
        h_new = o_g * jnp.tanh(c_new)

        out_ref[:, t, :] = h_new.astype(out_ref.dtype)

        if needs_mask:
            keep = (chunk * t_chunk + t) < t_valid
            h_new = jnp.where(keep, h_new, h)
            c_new = jnp.where(keep, c_new, c)
        return h_new, c_new

    h_fin, c_fin = jax.lax.fori_loop(
        0, t_chunk, step, (h_scr[...], c_scr[...]),
        unroll=min(unroll, t_chunk))

    h_scr[...] = h_fin
    c_scr[...] = c_fin

    @pl.when(chunk == pl.num_programs(1) - 1)
    def _():
        c_out_ref[...] = c_fin.astype(c_out_ref.dtype)


# ---------------------------------------------------------------------------
# Chunk / block sizing helpers
# ---------------------------------------------------------------------------
def _vmem_capacity_bytes():
    try:
        return int(pltpu.get_tpu_info().vmem_capacity_bytes)
    except Exception:
        return 64 * 1024 * 1024   # conservative v7x-style fallback


def _pick_batch_block(B):
    """Split the (fully independent) batch across the parallel grid axis when
    it is large enough — lets v7x's 2 TensorCores each take half."""
    if B >= 16 and B % 2 == 0:
        return B // 2
    return B


def _pick_time_chunk(T, b_blk, hidden_dim, vmem_budget_bytes,
                     gx_itemsize=4, out_itemsize=4):
    """Largest time chunk whose double-buffered gx + out blocks fit the VMEM
    budget; multiple of 16 when chunking; capped to bound per-chunk work."""
    per_step = b_blk * (4 * hidden_dim * gx_itemsize + hidden_dim * out_itemsize)
    max_steps = max(1, vmem_budget_bytes // (2 * per_step))
    t_chunk = int(min(T, max_steps, 128))
    if t_chunk < T:
        t_chunk = max(16, (t_chunk // 16) * 16)
    return t_chunk


# ---------------------------------------------------------------------------
# LSTM forward over the Pallas kernel
# ---------------------------------------------------------------------------
def lstm_forward(gx_btg, w_hh, *, unroll=8):
    """gx_btg: (B, T, 4H) f32 input projection (+bias), batch-first, gate order
    [i,f,o,g].  w_hh: (H, 4H) bf16.  Returns (outputs (B,T,H) f32, cell (B,H))."""
    B, T, G = gx_btg.shape
    H = w_hh.shape[0]
    assert G == 4 * H

    b_blk = _pick_batch_block(B)
    nb = B // b_blk

    vmem_cap = _vmem_capacity_bytes()
    t_chunk = _pick_time_chunk(T, b_blk, H, vmem_cap // 4,
                               gx_itemsize=gx_btg.dtype.itemsize)
    num_chunks = pl.cdiv(T, t_chunk)
    t_pad = num_chunks * t_chunk
    if t_pad != T:
        gx_btg = jnp.pad(gx_btg, ((0, 0), (0, t_pad - T), (0, 0)))

    # Explicit VMEM limit (critical on v7x's 64 MiB physical VMEM).
    gx_block = b_blk * t_chunk * G * gx_btg.dtype.itemsize
    out_block = b_blk * t_chunk * H * 4
    whh_bytes = H * G * w_hh.dtype.itemsize
    state_bytes = 2 * b_blk * H * 4
    needed = 2 * (gx_block + out_block) + 2 * whh_bytes + state_bytes + (4 << 20)
    vmem_limit = int(min(max(needed, 32 << 20), vmem_cap - (2 << 20)))

    kernel = functools.partial(_lstm_chunk_kernel, hidden_dim=H,
                               t_valid=T, unroll=unroll)

    outs, c_fin = pl.pallas_call(
        kernel,
        out_shape=(
            jax.ShapeDtypeStruct((B, t_pad, H), jnp.float32),  # per-step h
            jax.ShapeDtypeStruct((B, H), jnp.float32),         # final cell
        ),
        grid_spec=pltpu.PrefetchScalarGridSpec(
            num_scalar_prefetch=0,
            grid=(nb, num_chunks),
            in_specs=[
                pl.BlockSpec((b_blk, t_chunk, G), lambda b, c: (b, c, 0)),
                pl.BlockSpec((H, G), lambda b, c: (0, 0)),   # W_hh (constant)
            ],
            out_specs=[
                pl.BlockSpec((b_blk, t_chunk, H), lambda b, c: (b, c, 0)),
                pl.BlockSpec((b_blk, H), lambda b, c: (b, 0)),
            ],
            scratch_shapes=[
                pltpu.VMEM((b_blk, H), jnp.float32),   # h carry
                pltpu.VMEM((b_blk, H), jnp.float32),   # c carry
            ],
        ),
        compiler_params=pltpu.CompilerParams(
            dimension_semantics=("parallel", "arbitrary"),
            vmem_limit_bytes=vmem_limit,
        ),
    )(gx_btg, w_hh)

    if t_pad != T:
        outs = outs[:, :T, :]
    return outs, c_fin


# ---------------------------------------------------------------------------
# Parameter init (mirrors the PyTorch _init_weights scheme)
# ---------------------------------------------------------------------------
def xavier_uniform(key, shape, fan_in, fan_out):
    bound = jnp.sqrt(6.0 / (fan_in + fan_out))
    return jax.random.uniform(key, shape, jnp.float32, -bound, bound)


def orthogonal_init(key, rows, cols):
    n = max(rows, cols)
    a = jax.random.normal(key, (n, n), jnp.float32)
    q, r = jnp.linalg.qr(a)
    d = jnp.sign(jnp.diag(r))
    d = jnp.where(d == 0, 1.0, d)       # never zero a column
    q = q * d[None, :]
    return q[:rows, :cols]


def _permute_gate_columns(w):
    """PyTorch LSTM gate order [i, f, g, o] -> kernel order [i, f, o, g]."""
    i, f, g, o = jnp.split(w, 4, axis=-1)
    return jnp.concatenate([i, f, o, g], axis=-1)


def make_encoder_params(key, vocab_size, embedding_dim, hidden_dim):
    k_emb, k_ih, k_hh = jax.random.split(key, 3)
    # Embedding: PyTorch default N(0, 1)
    emb = jax.random.normal(k_emb, (vocab_size, embedding_dim), jnp.float32)
    # weight_ih_l0: (4H, E) xavier uniform -> stored transposed (E, 4H)
    w_ih_t = xavier_uniform(k_ih, (embedding_dim, 4 * hidden_dim),
                            fan_in=embedding_dim, fan_out=4 * hidden_dim)
    # weight_hh_l0: (4H, H) orthogonal (on the full stacked matrix, as in the
    # reference) -> stored transposed (H, 4H)
    w_hh_t = orthogonal_init(k_hh, 4 * hidden_dim, hidden_dim).T
    # biases filled with 0; b_ih + b_hh combined and folded into gx
    bias = jnp.zeros((1, 4 * hidden_dim), jnp.float32)
    # Permute gate columns once so the kernel uses two contiguous EUP launches.
    w_ih_t = _permute_gate_columns(w_ih_t)
    w_hh_t = _permute_gate_columns(w_hh_t)
    bias = _permute_gate_columns(bias)
    return dict(embedding=emb,
                w_ih=w_ih_t.astype(jnp.bfloat16),   # MXU operand
                w_hh=w_hh_t.astype(jnp.bfloat16),   # MXU operand
                bias=bias)


# ---------------------------------------------------------------------------
# Encoder forward (embedding gather + hoisted input projection in XLA,
# recurrence in Pallas). Matches PyTorch Encoder.forward for cell_type='lstm'.
# ---------------------------------------------------------------------------
def encoder_forward(params, src):
    """src: (B, T) int32 token ids.  Returns (outputs (B,T,H), hidden (1,B,H),
    cell (1,B,H))."""
    embedded = params["embedding"][src]                       # (B, T, E)
    # dropout = identity (eval mode)
    # Input projection for ALL timesteps hoisted off the serial recurrence,
    # emitted batch-first so XLA never materializes a transposed gx.
    gx = jnp.einsum("bte,eg->btg", embedded.astype(jnp.bfloat16),
                    params["w_ih"],
                    preferred_element_type=jnp.float32) + params["bias"]
    outputs, c_fin = lstm_forward(gx, params["w_hh"])         # (B,T,H), (B,H)
    hidden = outputs[:, -1, :][None]                          # (1, B, H) == h_T
    cell = c_fin[None]                                        # (1, B, H)
    return outputs, hidden, cell


if __name__ == "__main__":
    # Small shapes consistent with the module.
    VOCAB, E, H = 50, 32, 32
    B, T = 2, 8

    key = jax.random.PRNGKey(0)
    k_params, k_src = jax.random.split(key)

    params = make_encoder_params(k_params, VOCAB, E, H)
    src = jax.random.randint(k_src, (B, T), 0, VOCAB, dtype=jnp.int32)

    outputs, hidden, cell = jax.jit(encoder_forward)(params, src)
    jax.block_until_ready((outputs, hidden, cell))

    assert outputs.shape == (B, T, H)
    assert hidden.shape == (1, B, H)
    assert cell.shape == (1, B, H)
    print("KERNEL_OK")
</pallas_src>

<mosaic_0001>
module attributes {stable_mosaic.version = 11 : i64} {
  func.func @_lstm_chunk_kernel(%arg0: i32, %arg1: i32, %arg2: memref<2x8x128xf32, #tpu.memory_space<vmem>>, %arg3: memref<32x128xbf16, #tpu.memory_space<vmem>>, %arg4: memref<2x8x32xf32, #tpu.memory_space<vmem>>, %arg5: memref<2x32xf32, #tpu.memory_space<vmem>>, %arg6: memref<2x32xf32, #tpu.memory_space<vmem>>, %arg7: memref<2x32xf32, #tpu.memory_space<vmem>>) attributes {dimension_semantics = [#tpu.dimension_semantics<parallel>, #tpu.dimension_semantics<arbitrary>], iteration_bounds = array<i64: 1, 1>, scalar_prefetch = 0 : i64, scratch_operands = 2 : i64, tpu.core_type = #tpu.core_type<tc>, window_params = [{transform_indices = @transform_0, window_bounds = array<i64: 2, 8, 128>}, {pipeline_mode = #tpu.pipeline_mode<synchronous>, transform_indices = @transform_1, window_bounds = array<i64: 32, 128>}, {transform_indices = @transform_2, window_bounds = array<i64: 2, 8, 32>}, {transform_indices = @transform_3, window_bounds = array<i64: 2, 32>}]} {
    %c0_i32 = arith.constant 0 : i32
    %0 = arith.cmpi eq, %arg1, %c0_i32 : i32
    %1 = arith.extui %0 : i1 to i32
    %c0_i32_0 = arith.constant 0 : i32
    %2 = arith.cmpi ne, %1, %c0_i32_0 : i32
    scf.if %2 {
      %cst_74 = arith.constant 0.000000e+00 : f32
      %226 = vector.broadcast %cst_74 : f32 to vector<2x32xf32>
      %c0_75 = arith.constant 0 : index
      %c0_76 = arith.constant 0 : index
      %227 = vector.load %arg6[%c0_75, %c0_76] : memref<2x32xf32, #tpu.memory_space<vmem>>, vector<2x32xf32>
      tpu.vector_store %arg6[%c0_75, %c0_76], %226 {strides = array<i32>} : memref<2x32xf32, #tpu.memory_space<vmem>>, vector<2x32xf32>,
      %cst_77 = arith.constant 0.000000e+00 : f32
      %228 = vector.broadcast %cst_77 : f32 to vector<2x32xf32>
      %c0_78 = arith.constant 0 : index
      %c0_79 = arith.constant 0 : index
      %229 = vector.load %arg7[%c0_78, %c0_79] : memref<2x32xf32, #tpu.memory_space<vmem>>, vector<2x32xf32>
      tpu.vector_store %arg7[%c0_78, %c0_79], %228 {strides = array<i32>} : memref<2x32xf32, #tpu.memory_space<vmem>>, vector<2x32xf32>,
    } else {
    }
    %c0 = arith.constant 0 : index
    %c0_1 = arith.constant 0 : index
    %3 = vector.load %arg6[%c0, %c0_1] : memref<2x32xf32, #tpu.memory_space<vmem>>, vector<2x32xf32>
    %c0_2 = arith.constant 0 : index
    %c0_3 = arith.constant 0 : index
    %4 = vector.load %arg7[%c0_2, %c0_3] : memref<2x32xf32, #tpu.memory_space<vmem>>, vector<2x32xf32>
    %c0_i32_4 = arith.constant 0 : i32
    %c0_5 = arith.constant 0 : index
    %5 = arith.index_cast %c0_i32_4 : i32 to index
    %c0_6 = arith.constant 0 : index
    %6 = vector.load %arg2[%c0_5, %5, %c0_6] : memref<2x8x128xf32, #tpu.memory_space<vmem>>, vector<2x1x128xf32>
    %7 = vector.shape_cast %6 : vector<2x1x128xf32> to vector<2x128xf32>
    %8 = arith.truncf %3 : vector<2x32xf32> to vector<2x32xbf16>
    %c0_7 = arith.constant 0 : index
    %c0_8 = arith.constant 0 : index
    %9 = vector.load %arg3[%c0_7, %c0_8] : memref<32x128xbf16, #tpu.memory_space<vmem>>, vector<32x128xbf16>
    %cst = arith.constant dense<0.000000e+00> : vector<2x128xf32>
    %10 = tpu.matmul %8, %9, %cst {dimension_numbers = #tpu.dot_dimension_numbers<[1], [0], [0], [1], [0, 0, 1, 1], [], []>} : vector<2x32xbf16>, vector<32x128xbf16>, vector<2x128xf32> -> vector<2x128xf32>
    %11 = arith.addf %7, %10 : vector<2x128xf32>
    %12 = vector.extract_strided_slice %11 {offsets = [0, 0], sizes = [2, 96], strides = [1, 1]} : vector<2x128xf32> to vector<2x96xf32>
    %13 = arith.negf %12 : vector<2x96xf32>
    %14 = math.exp %13 : vector<2x96xf32>
    %cst_9 = arith.constant 1.000000e+00 : f32
    %15 = vector.broadcast %cst_9 : f32 to vector<2x96xf32>
    %16 = arith.addf %15, %14 : vector<2x96xf32>
    %17 = arith.divf %15, %16 : vector<2x96xf32>
    %18 = vector.extract_strided_slice %11 {offsets = [0, 96], sizes = [2, 32], strides = [1, 1]} : vector<2x128xf32> to vector<2x32xf32>
    %19 = math.tanh %18 : vector<2x32xf32>
    %20 = vector.extract_strided_slice %17 {offsets = [0, 0], sizes = [2, 32], strides = [1, 1]} : vector<2x96xf32> to vector<2x32xf32>
    %21 = vector.extract_strided_slice %17 {offsets = [0, 32], sizes = [2, 32], strides = [1, 1]} : vector<2x96xf32> to vector<2x32xf32>
    %22 = vector.extract_strided_slice %17 {offsets = [0, 64], sizes = [2, 32], strides = [1, 1]} : vector<2x96xf32> to vector<2x32xf32>
    %23 = arith.mulf %21, %4 : vector<2x32xf32>
    %24 = arith.mulf %20, %19 : vector<2x32xf32>
    %25 = arith.addf %23, %24 : vector<2x32xf32>
    %26 = math.tanh %25 : vector<2x32xf32>
    %27 = arith.mulf %22, %26 : vector<2x32xf32>
    %c0_10 = arith.constant 0 : index
    %28 = arith.index_cast %c0_i32_4 : i32 to index
    %c0_11 = arith.constant 0 : index
    %29 = vector.load %arg4[%c0_10, %28, %c0_11] : memref<2x8x32xf32, #tpu.memory_space<vmem>>, vector<2x1x32xf32>
    %30 = vector.shape_cast %29 : vector<2x1x32xf32> to vector<2x32xf32>
    %31 = vector.shape_cast %27 : vector<2x32xf32> to vector<2x1x32xf32>
    tpu.vector_store %arg4[%c0_10, %28, %c0_11], %31 {strides = array<i32>} : memref<2x8x32xf32, #tpu.memory_space<vmem>>, vector<2x1x32xf32>,
    %c1_i32 = arith.constant 1 : i32
    %c0_12 = arith.constant 0 : index
    %32 = arith.index_cast %c1_i32 : i32 to index
    %c0_13 = arith.constant 0 : index
    %33 = vector.load %arg2[%c0_12, %32, %c0_13] : memref<2x8x128xf32, #tpu.memory_space<vmem>>, vector<2x1x128xf32>
    %34 = vector.shape_cast %33 : vector<2x1x128xf32> to vector<2x128xf32>
    %35 = arith.truncf %27 : vector<2x32xf32> to vector<2x32xbf16>
    %c0_14 = arith.constant 0 : index
    %c0_15 = arith.constant 0 : index
    %36 = vector.load %arg3[%c0_14, %c0_15] : memref<32x128xbf16, #tpu.memory_space<vmem>>, vector<32x128xbf16>
    %cst_16 = arith.constant dense<0.000000e+00> : vector<2x128xf32>
    %37 = tpu.matmul %35, %36, %cst_16 {dimension_numbers = #tpu.dot_dimension_numbers<[1], [0], [0], [1], [0, 0, 1, 1], [], []>} : vector<2x32xbf16>, vector<32x128xbf16>, vector<2x128xf32> -> vector<2x128xf32>
    %38 = arith.addf %34, %37 : vector<2x128xf32>
    %39 = vector.extract_strided_slice %38 {offsets = [0, 0], sizes = [2, 96], strides = [1, 1]} : vector<2x128xf32> to vector<2x96xf32>
    %40 = arith.negf %39 : vector<2x96xf32>
    %41 = math.exp %40 : vector<2x96xf32>
    %cst_17 = arith.constant 1.000000e+00 : f32
    %42 = vector.broadcast %cst_17 : f32 to vector<2x96xf32>
    %43 = arith.addf %42, %41 : vector<2x96xf32>
    %44 = arith.divf %42, %43 : vector<2x96xf32>
    %45 = vector.extract_strided_slice %38 {offsets = [0, 96], sizes = [2, 32], strides = [1, 1]} : vector<2x128xf32> to vector<2x32xf32>
    %46 = math.tanh %45 : vector<2x32xf32>
    %47 = vector.extract_strided_slice %44 {offsets = [0, 0], sizes = [2, 32], strides = [1, 1]} : vector<2x96xf32> to vector<2x32xf32>
    %48 = vector.extract_strided_slice %44 {offsets = [0, 32], sizes = [2, 32], strides = [1, 1]} : vector<2x96xf32> to vector<2x32xf32>
    %49 = vector.extract_strided_slice %44 {offsets = [0, 64], sizes = [2, 32], strides = [1, 1]} : vector<2x96xf32> to vector<2x32xf32>
    %50 = arith.mulf %48, %25 : vector<2x32xf32>
    %51 = arith.mulf %47, %46 : vector<2x32xf32>
    %52 = arith.addf %50, %51 : vector<2x32xf32>
    %53 = math.tanh %52 : vector<2x32xf32>
    %54 = arith.mulf %49, %53 : vector<2x32xf32>
    %c0_18 = arith.constant 0 : index
    %55 = arith.index_cast %c1_i32 : i32 to index
    %c0_19 = arith.constant 0 : index
    %56 = vector.load %arg4[%c0_18, %55, %c0_19] : memref<2x8x32xf32, #tpu.memory_space<vmem>>, vector<2x1x32xf32>
    %57 = vector.shape_cast %56 : vector<2x1x32xf32> to vector<2x32xf32>
    %58 = vector.shape_cast %54 : vector<2x32xf32> to vector<2x1x32xf32>
    tpu.vector_store %arg4[%c0_18, %55, %c0_19], %58 {strides = array<i32>} : memref<2x8x32xf32, #tpu.memory_space<vmem>>, vector<2x1x32xf32>,
    %c2_i32 = arith.constant 2 : i32
    %c0_20 = arith.constant 0 : index
    %59 = arith.index_cast %c2_i32 : i32 to index
    %c0_21 = arith.constant 0 : index
    %60 = vector.load %arg2[%c0_20, %59, %c0_21] : memref<2x8x128xf32, #tpu.memory_space<vmem>>, vector<2x1x128xf32>
    %61 = vector.shape_cast %60 : vector<2x1x128xf32> to vector<2x128xf32>
    %62 = arith.truncf %54 : vector<2x32xf32> to vector<2x32xbf16>
    %c0_22 = arith.constant 0 : index
    %c0_23 = arith.constant 0 : index
    %63 = vector.load %arg3[%c0_22, %c0_23] : memref<32x128xbf16, #tpu.memory_space<vmem>>, vector<32x128xbf16>
    %cst_24 = arith.constant dense<0.000000e+00> : vector<2x128xf32>
    %64 = tpu.matmul %62, %63, %cst_24 {dimension_numbers = #tpu.dot_dimension_numbers<[1], [0], [0], [1], [0, 0, 1, 1], [], []>} : vector<2x32xbf16>, vector<32x128xbf16>, vector<2x128xf32> -> vector<2x128xf32>
    %65 = arith.addf %61, %64 : vector<2x128xf32>
    %66 = vector.extract_strided_slice %65 {offsets = [0, 0], sizes = [2, 96], strides = [1, 1]} : vector<2x128xf32> to vector<2x96xf32>
    %67 = arith.negf %66 : vector<2x96xf32>
    %68 = math.exp %67 : vector<2x96xf32>
    %cst_25 = arith.constant 1.000000e+00 : f32
    %69 = vector.broadcast %cst_25 : f32 to vector<2x96xf32>
    %70 = arith.addf %69, %68 : vector<2x96xf32>
    %71 = arith.divf %69, %70 : vector<2x96xf32>
    %72 = vector.extract_strided_slice %65 {offsets = [0, 96], sizes = [2, 32], strides = [1, 1]} : vector<2x128xf32> to vector<2x32xf32>
    %73 = math.tanh %72 : vector<2x32xf32>
    %74 = vector.extract_strided_slice %71 {offsets = [0, 0], sizes = [2, 32], strides = [1, 1]} : vector<2x96xf32> to vector<2x32xf32>
    %75 = vector.extract_strided_slice %71 {offsets = [0, 32], sizes = [2, 32], strides = [1, 1]} : vector<2x96xf32> to vector<2x32xf32>
    %76 = vector.extract_strided_slice %71 {offsets = [0, 64], sizes = [2, 32], strides = [1, 1]} : vector<2x96xf32> to vector<2x32xf32>
    %77 = arith.mulf %75, %52 : vector<2x32xf32>
    %78 = arith.mulf %74, %73 : vector<2x32xf32>
    %79 = arith.addf %77, %78 : vector<2x32xf32>
    %80 = math.tanh %79 : vector<2x32xf32>
    %81 = arith.mulf %76, %80 : vector<2x32xf32>
    %c0_26 = arith.constant 0 : index
    %82 = arith.index_cast %c2_i32 : i32 to index
    %c0_27 = arith.constant 0 : index
    %83 = vector.load %arg4[%c0_26, %82, %c0_27] : memref<2x8x32xf32, #tpu.memory_space<vmem>>, vector<2x1x32xf32>
    %84 = vector.shape_cast %83 : vector<2x1x32xf32> to vector<2x32xf32>
    %85 = vector.shape_cast %81 : vector<2x32xf32> to vector<2x1x32xf32>
    tpu.vector_store %arg4[%c0_26, %82, %c0_27], %85 {strides = array<i32>} : memref<2x8x32xf32, #tpu.memory_space<vmem>>, vector<2x1x32xf32>,
    %c3_i32 = arith.constant 3 : i32
    %c0_28 = arith.constant 0 : index
    %86 = arith.index_cast %c3_i32 : i32 to index
    %c0_29 = arith.constant 0 : index
    %87 = vector.load %arg2[%c0_28, %86, %c0_29] : memref<2x8x128xf32, #tpu.memory_space<vmem>>, vector<2x1x128xf32>
    %88 = vector.shape_cast %87 : vector<2x1x128xf32> to vector<2x128xf32>
    %89 = arith.truncf %81 : vector<2x32xf32> to vector<2x32xbf16>
    %c0_30 = arith.constant 0 : index
    %c0_31 = arith.constant 0 : index
    %90 = vector.load %arg3[%c0_30, %c0_31] : memref<32x128xbf16, #tpu.memory_space<vmem>>, vector<32x128xbf16>
    %cst_32 = arith.constant dense<0.000000e+00> : vector<2x128xf32>
    %91 = tpu.matmul %89, %90, %cst_32 {dimension_numbers = #tpu.dot_dimension_numbers<[1], [0], [0], [1], [0, 0, 1, 1], [], []>} : vector<2x32xbf16>, vector<32x128xbf16>, vector<2x128xf32> -> vector<2x128xf32>
    %92 = arith.addf %88, %91 : vector<2x128xf32>
    %93 = vector.extract_strided_slice %92 {offsets = [0, 0], sizes = [2, 96], strides = [1, 1]} : vector<2x128xf32> to vector<2x96xf32>
    %94 = arith.negf %93 : vector<2x96xf32>
    %95 = math.exp %94 : vector<2x96xf32>
    %cst_33 = arith.constant 1.000000e+00 : f32
    %96 = vector.broadcast %cst_33 : f32 to vector<2x96xf32>
    %97 = arith.addf %96, %95 : vector<2x96xf32>
    %98 = arith.divf %96, %97 : vector<2x96xf32>
    %99 = vector.extract_strided_slice %92 {offsets = [0, 96], sizes = [2, 32], strides = [1, 1]} : vector<2x128xf32> to vector<2x32xf32>
    %100 = math.tanh %99 : vector<2x32xf32>
    %101 = vector.extract_strided_slice %98 {offsets = [0, 0], sizes = [2, 32], strides = [1, 1]} : vector<2x96xf32> to vector<2x32xf32>
    %102 = vector.extract_strided_slice %98 {offsets = [0, 32], sizes = [2, 32], strides = [1, 1]} : vector<2x96xf32> to vector<2x32xf32>
    %103 = vector.extract_strided_slice %98 {offsets = [0, 64], sizes = [2, 32], strides = [1, 1]} : vector<2x96xf32> to vector<2x32xf32>
    %104 = arith.mulf %102, %79 : vector<2x32xf32>
    %105 = arith.mulf %101, %100 : vector<2x32xf32>
    %106 = arith.addf %104, %105 : vector<2x32xf32>
    %107 = math.tanh %106 : vector<2x32xf32>
    %108 = arith.mulf %103, %107 : vector<2x32xf32>
    %c0_34 = arith.constant 0 : index
    %109 = arith.index_cast %c3_i32 : i32 to index
    %c0_35 = arith.constant 0 : index
    %110 = vector.load %arg4[%c0_34, %109, %c0_35] : memref<2x8x32xf32, #tpu.memory_space<vmem>>, vector<2x1x32xf32>
    %111 = vector.shape_cast %110 : vector<2x1x32xf32> to vector<2x32xf32>
    %112 = vector.shape_cast %108 : vector<2x32xf32> to vector<2x1x32xf32>
    tpu.vector_store %arg4[%c0_34, %109, %c0_35], %112 {strides = array<i32>} : memref<2x8x32xf32, #tpu.memory_space<vmem>>, vector<2x1x32xf32>,
    %c4_i32 = arith.constant 4 : i32
    %c0_36 = arith.constant 0 : index
    %113 = arith.index_cast %c4_i32 : i32 to index
    %c0_37 = arith.constant 0 : index
    %114 = vector.load %arg2[%c0_36, %113, %c0_37] : memref<2x8x128xf32, #tpu.memory_space<vmem>>, vector<2x1x128xf32>
    %115 = vector.shape_cast %114 : vector<2x1x128xf32> to vector<2x128xf32>
    %116 = arith.truncf %108 : vector<2x32xf32> to vector<2x32xbf16>
    %c0_38 = arith.constant 0 : index
    %c0_39 = arith.constant 0 : index
    %117 = vector.load %arg3[%c0_38, %c0_39] : memref<32x128xbf16, #tpu.memory_space<vmem>>, vector<32x128xbf16>
    %cst_40 = arith.constant dense<0.000000e+00> : vector<2x128xf32>
    %118 = tpu.matmul %116, %117, %cst_40 {dimension_numbers = #tpu.dot_dimension_numbers<[1], [0], [0], [1], [0, 0, 1, 1], [], []>} : vector<2x32xbf16>, vector<32x128xbf16>, vector<2x128xf32> -> vector<2x128xf32>
    %119 = arith.addf %115, %118 : vector<2x128xf32>
    %120 = vector.extract_strided_slice %119 {offsets = [0, 0], sizes = [2, 96], strides = [1, 1]} : vector<2x128xf32> to vector<2x96xf32>
    %121 = arith.negf %120 : vector<2x96xf32>
    %122 = math.exp %121 : vector<2x96xf32>
    %cst_41 = arith.constant 1.000000e+00 : f32
    %123 = vector.broadcast %cst_41 : f32 to vector<2x96xf32>
    %124 = arith.addf %123, %122 : vector<2x96xf32>
    %125 = arith.divf %123, %124 : vector<2x96xf32>
    %126 = vector.extract_strided_slice %119 {offsets = [0, 96], sizes = [2, 32], strides = [1, 1]} : vector<2x128xf32> to vector<2x32xf32>
    %127 = math.tanh %126 : vector<2x32xf32>
    %128 = vector.extract_strided_slice %125 {offsets = [0, 0], sizes = [2, 32], strides = [1, 1]} : vector<2x96xf32> to vector<2x32xf32>
    %129 = vector.extract_strided_slice %125 {offsets = [0, 32], sizes = [2, 32], strides = [1, 1]} : vector<2x96xf32> to vector<2x32xf32>
    %130 = vector.extract_strided_slice %125 {offsets = [0, 64], sizes = [2, 32], strides = [1, 1]} : vector<2x96xf32> to vector<2x32xf32>
    %131 = arith.mulf %129, %106 : vector<2x32xf32>
    %132 = arith.mulf %128, %127 : vector<2x32xf32>
    %133 = arith.addf %131, %132 : vector<2x32xf32>
    %134 = math.tanh %133 : vector<2x32xf32>
    %135 = arith.mulf %130, %134 : vector<2x32xf32>
    %c0_42 = arith.constant 0 : index
    %136 = arith.index_cast %c4_i32 : i32 to index
    %c0_43 = arith.constant 0 : index
    %137 = vector.load %arg4[%c0_42, %136, %c0_43] : memref<2x8x32xf32, #tpu.memory_space<vmem>>, vector<2x1x32xf32>
    %138 = vector.shape_cast %137 : vector<2x1x32xf32> to vector<2x32xf32>
    %139 = vector.shape_cast %135 : vector<2x32xf32> to vector<2x1x32xf32>
    tpu.vector_store %arg4[%c0_42, %136, %c0_43], %139 {strides = array<i32>} : memref<2x8x32xf32, #tpu.memory_space<vmem>>, vector<2x1x32xf32>,
    %c5_i32 = arith.constant 5 : i32
    %c0_44 = arith.constant 0 : index
    %140 = arith.index_cast %c5_i32 : i32 to index
    %c0_45 = arith.constant 0 : index
    %141 = vector.load %arg2[%c0_44, %140, %c0_45] : memref<2x8x128xf32, #tpu.memory_space<vmem>>, vector<2x1x128xf32>
    %142 = vector.shape_cast %141 : vector<2x1x128xf32> to vector<2x128xf32>
    %143 = arith.truncf %135 : vector<2x32xf32> to vector<2x32xbf16>
    %c0_46 = arith.constant 0 : index
    %c0_47 = arith.constant 0 : index
    %144 = vector.load %arg3[%c0_46, %c0_47] : memref<32x128xbf16, #tpu.memory_space<vmem>>, vector<32x128xbf16>
    %cst_48 = arith.constant dense<0.000000e+00> : vector<2x128xf32>
    %145 = tpu.matmul %143, %144, %cst_48 {dimension_numbers = #tpu.dot_dimension_numbers<[1], [0], [0], [1], [0, 0, 1, 1], [], []>} : vector<2x32xbf16>, vector<32x128xbf16>, vector<2x128xf32> -> vector<2x128xf32>
    %146 = arith.addf %142, %145 : vector<2x128xf32>
    %147 = vector.extract_strided_slice %146 {offsets = [0, 0], sizes = [2, 96], strides = [1, 1]} : vector<2x128xf32> to vector<2x96xf32>
    %148 = arith.negf %147 : vector<2x96xf32>
    %149 = math.exp %148 : vector<2x96xf32>
    %cst_49 = arith.constant 1.000000e+00 : f32
    %150 = vector.broadcast %cst_49 : f32 to vector<2x96xf32>
    %151 = arith.addf %150, %149 : vector<2x96xf32>
    %152 = arith.divf %150, %151 : vector<2x96xf32>
    %153 = vector.extract_strided_slice %146 {offsets = [0, 96], sizes = [2, 32], strides = [1, 1]} : vector<2x128xf32> to vector<2x32xf32>
    %154 = math.tanh %153 : vector<2x32xf32>
    %155 = vector.extract_strided_slice %152 {offsets = [0, 0], sizes = [2, 32], strides = [1, 1]} : vector<2x96xf32> to vector<2x32xf32>
    %156 = vector.extract_strided_slice %152 {offsets = [0, 32], sizes = [2, 32], strides = [1, 1]} : vector<2x96xf32> to vector<2x32xf32>
    %157 = vector.extract_strided_slice %152 {offsets = [0, 64], sizes = [2, 32], strides = [1, 1]} : vector<2x96xf32> to vector<2x32xf32>
    %158 = arith.mulf %156, %133 : vector<2x32xf32>
    %159 = arith.mulf %155, %154 : vector<2x32xf32>
    %160 = arith.addf %158, %159 : vector<2x32xf32>
    %161 = math.tanh %160 : vector<2x32xf32>
    %162 = arith.mulf %157, %161 : vector<2x32xf32>
    %c0_50 = arith.constant 0 : index
    %163 = arith.index_cast %c5_i32 : i32 to index
    %c0_51 = arith.constant 0 : index
    %164 = vector.load %arg4[%c0_50, %163, %c0_51] : memref<2x8x32xf32, #tpu.memory_space<vmem>>, vector<2x1x32xf32>
    %165 = vector.shape_cast %164 : vector<2x1x32xf32> to vector<2x32xf32>
    %166 = vector.shape_cast %162 : vector<2x32xf32> to vector<2x1x32xf32>
    tpu.vector_store %arg4[%c0_50, %163, %c0_51], %166 {strides = array<i32>} : memref<2x8x32xf32, #tpu.memory_space<vmem>>, vector<2x1x32xf32>,
    %c6_i32 = arith.constant 6 : i32
    %c0_52 = arith.constant 0 : index
    %167 = arith.index_cast %c6_i32 : i32 to index
    %c0_53 = arith.constant 0 : index
    %168 = vector.load %arg2[%c0_52, %167, %c0_53] : memref<2x8x128xf32, #tpu.memory_space<vmem>>, vector<2x1x128xf32>
    %169 = vector.shape_cast %168 : vector<2x1x128xf32> to vector<2x128xf32>
    %170 = arith.truncf %162 : vector<2x32xf32> to vector<2x32xbf16>
    %c0_54 = arith.constant 0 : index
    %c0_55 = arith.constant 0 : index
    %171 = vector.load %arg3[%c0_54, %c0_55] : memref<32x128xbf16, #tpu.memory_space<vmem>>, vector<32x128xbf16>
    %cst_56 = arith.constant dense<0.000000e+00> : vector<2x128xf32>
    %172 = tpu.matmul %170, %171, %cst_56 {dimension_numbers = #tpu.dot_dimension_numbers<[1], [0], [0], [1], [0, 0, 1, 1], [], []>} : vector<2x32xbf16>, vector<32x128xbf16>, vector<2x128xf32> -> vector<2x128xf32>
    %173 = arith.addf %169, %172 : vector<2x128xf32>
    %174 = vector.extract_strided_slice %173 {offsets = [0, 0], sizes = [2, 96], strides = [1, 1]} : vector<2x128xf32> to vector<2x96xf32>
    %175 = arith.negf %174 : vector<2x96xf32>
    %176 = math.exp %175 : vector<2x96xf32>
    %cst_57 = arith.constant 1.000000e+00 : f32
    %177 = vector.broadcast %cst_57 : f32 to vector<2x96xf32>
    %178 = arith.addf %177, %176 : vector<2x96xf32>
    %179 = arith.divf %177, %178 : vector<2x96xf32>
    %180 = vector.extract_strided_slice %173 {offsets = [0, 96], sizes = [2, 32], strides = [1, 1]} : vector<2x128xf32> to vector<2x32xf32>
    %181 = math.tanh %180 : vector<2x32xf32>
    %182 = vector.extract_strided_slice %179 {offsets = [0, 0], sizes = [2, 32], strides = [1, 1]} : vector<2x96xf32> to vector<2x32xf32>
    %183 = vector.extract_strided_slice %179 {offsets = [0, 32], sizes = [2, 32], strides = [1, 1]} : vector<2x96xf32> to vector<2x32xf32>
    %184 = vector.extract_strided_slice %179 {offsets = [0, 64], sizes = [2, 32], strides = [1, 1]} : vector<2x96xf32> to vector<2x32xf32>
    %185 = arith.mulf %183, %160 : vector<2x32xf32>
    %186 = arith.mulf %182, %181 : vector<2x32xf32>
    %187 = arith.addf %185, %186 : vector<2x32xf32>
    %188 = math.tanh %187 : vector<2x32xf32>
    %189 = arith.mulf %184, %188 : vector<2x32xf32>
    %c0_58 = arith.constant 0 : index
    %190 = arith.index_cast %c6_i32 : i32 to index
    %c0_59 = arith.constant 0 : index
    %191 = vector.load %arg4[%c0_58, %190, %c0_59] : memref<2x8x32xf32, #tpu.memory_space<vmem>>, vector<2x1x32xf32>
    %192 = vector.shape_cast %191 : vector<2x1x32xf32> to vector<2x32xf32>
    %193 = vector.shape_cast %189 : vector<2x32xf32> to vector<2x1x32xf32>
    tpu.vector_store %arg4[%c0_58, %190, %c0_59], %193 {strides = array<i32>} : memref<2x8x32xf32, #tpu.memory_space<vmem>>, vector<2x1x32xf32>,
    %c7_i32 = arith.constant 7 : i32
    %c0_60 = arith.constant 0 : index
    %194 = arith.index_cast %c7_i32 : i32 to index
    %c0_61 = arith.constant 0 : index
    %195 = vector.load %arg2[%c0_60, %194, %c0_61] : memref<2x8x128xf32, #tpu.memory_space<vmem>>, vector<2x1x128xf32>
    %196 = vector.shape_cast %195 : vector<2x1x128xf32> to vector<2x128xf32>
    %197 = arith.truncf %189 : vector<2x32xf32> to vector<2x32xbf16>
    %c0_62 = arith.constant 0 : index
    %c0_63 = arith.constant 0 : index
    %198 = vector.load %arg3[%c0_62, %c0_63] : memref<32x128xbf16, #tpu.memory_space<vmem>>, vector<32x128xbf16>
    %cst_64 = arith.constant dense<0.000000e+00> : vector<2x128xf32>
    %199 = tpu.matmul %197, %198, %cst_64 {dimension_numbers = #tpu.dot_dimension_numbers<[1], [0], [0], [1], [0, 0, 1, 1], [], []>} : vector<2x32xbf16>, vector<32x128xbf16>, vector<2x128xf32> -> vector<2x128xf32>
    %200 = arith.addf %196, %199 : vector<2x128xf32>
    %201 = vector.extract_strided_slice %200 {offsets = [0, 0], sizes = [2, 96], strides = [1, 1]} : vector<2x128xf32> to vector<2x96xf32>
    %202 = arith.negf %201 : vector<2x96xf32>
    %203 = math.exp %202 : vector<2x96xf32>
    %cst_65 = arith.constant 1.000000e+00 : f32
    %204 = vector.broadcast %cst_65 : f32 to vector<2x96xf32>
    %205 = arith.addf %204, %203 : vector<2x96xf32>
    %206 = arith.divf %204, %205 : vector<2x96xf32>
    %207 = vector.extract_strided_slice %200 {offsets = [0, 96], sizes = [2, 32], strides = [1, 1]} : vector<2x128xf32> to vector<2x32xf32>
    %208 = math.tanh %207 : vector<2x32xf32>
    %209 = vector.extract_strided_slice %206 {offsets = [0, 0], sizes = [2, 32], strides = [1, 1]} : vector<2x96xf32> to vector<2x32xf32>
    %210 = vector.extract_strided_slice %206 {offsets = [0, 32], sizes = [2, 32], strides = [1, 1]} : vector<2x96xf32> to vector<2x32xf32>
    %211 = vector.extract_strided_slice %206 {offsets = [0, 64], sizes = [2, 32], strides = [1, 1]} : vector<2x96xf32> to vector<2x32xf32>
    %212 = arith.mulf %210, %187 : vector<2x32xf32>
    %213 = arith.mulf %209, %208 : vector<2x32xf32>
    %214 = arith.addf %212, %213 : vector<2x32xf32>
    %215 = math.tanh %214 : vector<2x32xf32>
    %216 = arith.mulf %211, %215 : vector<2x32xf32>
    %c0_66 = arith.constant 0 : index
    %217 = arith.index_cast %c7_i32 : i32 to index
    %c0_67 = arith.constant 0 : index
    %218 = vector.load %arg4[%c0_66, %217, %c0_67] : memref<2x8x32xf32, #tpu.memory_space<vmem>>, vector<2x1x32xf32>
    %219 = vector.shape_cast %218 : vector<2x1x32xf32> to vector<2x32xf32>
    %220 = vector.shape_cast %216 : vector<2x32xf32> to vector<2x1x32xf32>
    tpu.vector_store %arg4[%c0_66, %217, %c0_67], %220 {strides = array<i32>} : memref<2x8x32xf32, #tpu.memory_space<vmem>>, vector<2x1x32xf32>,
    %c8_i32 = arith.constant 8 : i32
    %c0_68 = arith.constant 0 : index
    %c0_69 = arith.constant 0 : index
    %221 = vector.load %arg6[%c0_68, %c0_69] : memref<2x32xf32, #tpu.memory_space<vmem>>, vector<2x32xf32>
    tpu.vector_store %arg6[%c0_68, %c0_69], %216 {strides = array<i32>} : memref<2x32xf32, #tpu.memory_space<vmem>>, vector<2x32xf32>,
    %c0_70 = arith.constant 0 : index
    %c0_71 = arith.constant 0 : index
    %222 = vector.load %arg7[%c0_70, %c0_71] : memref<2x32xf32, #tpu.memory_space<vmem>>, vector<2x32xf32>
    tpu.vector_store %arg7[%c0_70, %c0_71], %214 {strides = array<i32>} : memref<2x32xf32, #tpu.memory_space<vmem>>, vector<2x32xf32>,
    %c0_i32_72 = arith.constant 0 : i32
    %223 = arith.cmpi eq, %arg1, %c0_i32_72 : i32
    %224 = arith.extui %223 : i1 to i32
    %c0_i32_73 = arith.constant 0 : i32
    %225 = arith.cmpi ne, %224, %c0_i32_73 : i32
    scf.if %225 {
      %c0_74 = arith.constant 0 : index
      %c0_75 = arith.constant 0 : index
      %226 = vector.load %arg5[%c0_74, %c0_75] : memref<2x32xf32, #tpu.memory_space<vmem>>, vector<2x32xf32>
      tpu.vector_store %arg5[%c0_74, %c0_75], %214 {strides = array<i32>} : memref<2x32xf32, #tpu.memory_space<vmem>>, vector<2x32xf32>,
    } else {
    }
    return
  }
  func.func @transform_0(%arg0: i32, %arg1: i32) -> (i32, i32, i32) {
    %c0_i32 = arith.constant 0 : i32
    %c0_i32_0 = arith.constant 0 : i32
    return %arg0, %arg1, %c0_i32 : i32, i32, i32
  }
  func.func @transform_1(%arg0: i32, %arg1: i32) -> (i32, i32) {
    %c0_i32 = arith.constant 0 : i32
    %c0_i32_0 = arith.constant 0 : i32
    %c0_i32_1 = arith.constant 0 : i32
    return %c0_i32, %c0_i32_0 : i32, i32
  }
  func.func @transform_2(%arg0: i32, %arg1: i32) -> (i32, i32, i32) {
    %c0_i32 = arith.constant 0 : i32
    %c0_i32_0 = arith.constant 0 : i32
    return %arg0, %arg1, %c0_i32 : i32, i32, i32
  }
  func.func @transform_3(%arg0: i32, %arg1: i32) -> (i32, i32) {
    %c0_i32 = arith.constant 0 : i32
    %c0_i32_0 = arith.constant 0 : i32
    return %arg0, %c0_i32 : i32, i32
  }
}

</mosaic_0001>

<llo_original>
// kernel: encoder_forward.1
$region0: #{encoder_forward.1}
  #allocation0 [shape = 'u32[]', space=smem, size = 0x4, offset = 0x4, fixed_abs, tag = 'smem constant byte address 0x4 - core index']
  #allocation1 [shape = 'u32[144,128]{1,0:T(1,128)}', space=vmem, size = 0x12000, scoped, tag = 'internal scratch']
  #allocation2 [shape = 'f32[2,32]{1,0:T(2,128)}', space=vmem, size = 0x400, scoped, tag = 'scratch operand']
  #allocation3 [shape = 'f32[2,32]{1,0:T(2,128)}', space=vmem, size = 0x400, scoped, tag = 'scratch operand']
  %s0 = inlined_call_operand.vmem [shape: f32[2,8,128], index: 0, kind: input, shape index: {}]
  %s1 = inlined_call_operand.vmem [shape: bf16[32,128], index: 1, kind: input, shape index: {}]
  %s2 = inlined_call_operand.vmem [shape: f32[2,8,32], index: 2, kind: output, shape index: {0}]
  %s3 = inlined_call_operand.hbm [shape: f32[2,32], index: 3, kind: output, shape index: {1}]
  %4 = xla_tuple %s2, %s3
  %s5 = sld [smem:[#allocation0]]
  $region34: #{encoder_forward.1} parent=0
    _
  %s7 = ssub.s32 1, %s5
  %s8 = scalar_select 0, %s7, %s5
  $region1: #{encoder_forward.1} parent=0
    #allocation4 [shape = 'u8[1024]{0}', space=vmem, size = 0x400, scoped, tag = 'output window, operand 1, single buffered']
    #allocation5 [shape = 's32[1]{0}', space=sflag, size = 0x4, scoped, tag = 'scoped memory for encoder_forward.1']
    %9 = vsyncpa [#allocation5], 0
    // Predicated region
    $region2: #{encoder_forward.1} parent=1 // pred_check
      _
    $region3: #{encoder_forward.1} parent=1 // pred_check_branch
      %11 = sbr.rel (0) target = $region5
    $region4: #{encoder_forward.1} parent=1 // pred_region
      _
    $region5: #{encoder_forward.1} parent=1 // pred_fallthru
      _
    // Predicated region
    $region6: #{encoder_forward.1} parent=1 // pred_check
      _
    $region7: #{encoder_forward.1} parent=1 // pred_check_branch
      %13 = sbr.rel (0) target = $region9
    $region8: #{encoder_forward.1} parent=1 // pred_region
      _
    $region9: #{encoder_forward.1} parent=1 // pred_fallthru
      _
    %p15 = scmp.eq.s32.totalorder 0, 0
    // Predicated region
    $region10: #{encoder_forward.1} parent=1 // pred_check
      %p16 = pneg %p15
    $region11: #{encoder_forward.1} parent=1 // pred_check_branch
      %18 = sbr.rel (%p16) target = $region13
    $region12: #{encoder_forward.1} parent=1 // pred_region
      %vm19 = vcmask 254976
      %20 = vst.msk [vmem:[#allocation2] sm:$0x3] %vm19, 0.0
      %21 = vst.msk [vmem:[#allocation3] sm:$0x3] %vm19, 0.0
    $region13: #{encoder_forward.1} parent=1 // pred_fallthru
      _
    %v22 = vld [vmem:[#allocation2] sm:$0x3]
    %v23 = vld [vmem:[#allocation3] sm:$0x3]
    %v24 = vld [vmem:[%s0] sm:$0x1]
    %v25 = vld [vmem:[%s0 + $0x8] sm:$0x1]
    %v26 = vpack.c.bf16 %v22, %v22
    %v27 = vld [vmem:[%s1] sm:$0xf]
    %v28 = vld [vmem:[%s1 + $0x4] sm:$0xf]
    %v29 = vld [vmem:[%s1 + $0x8] sm:$0xf]
    %v30 = vld [vmem:[%s1 + $0xc] sm:$0xf]
    %v35 = vunpack.c.l.b16 %v27
    %v36 = vunpack.c.l.b16 %v28
    %v37 = vunpack.c.l.b16 %v29
    %v38 = vunpack.c.l.b16 %v30
    %v39 = vpack.c.b16 %v36, %v35
    %v40 = vpack.c.b16 %v38, %v37
    %vm43 = vcmask 261120
    %v45 = vsel %vm43, %v26, 0
    %47 = vmatprep.subr.bf16.mxu0 0
    %48 = vmatpush1.bf16.msra.mxu0 %v39
    %49 = vmatprep.subr.bf16.mxu0 0
    %50 = vmatpush1.bf16.msra.mxu0 %v40
    %51 = vmatprep.subr.bf16.mxu0 0
    %52 = vmatpush1.bf16.msra.mxu0 0
    %53 = vmatprep.subr.bf16.mxu0 0
    %54 = vmatpush1.bf16.msra.mxu0 0
    %55 = vmatprep.subr.bf16.mxu0 0
    %56 = vmatpush1.bf16.msra.mxu0 0
    %57 = vmatprep.subr.bf16.mxu0 0
    %58 = vmatpush1.bf16.msra.mxu0 0
    %59 = vmatprep.subr.bf16.mxu0 0
    %60 = vmatpush1.bf16.msra.mxu0 0
    %61 = vmatprep.subr.bf16.mxu0 0
    %62 = vmatpush1.bf16.msra.mxu0 0
    %63 = vmatprep.subr.bf16.mxu0 0
    %64 = vmatpush1.bf16.msra.mxu0 0
    %65 = vmatprep.subr.bf16.mxu0 0
    %66 = vmatpush1.bf16.msra.mxu0 0
    %67 = vmatprep.subr.bf16.mxu0 0
    %68 = vmatpush1.bf16.msra.mxu0 0
    %69 = vmatprep.subr.bf16.mxu0 0
    %70 = vmatpush1.bf16.msra.mxu0 0
    %71 = vmatprep.subr.bf16.mxu0 0
    %72 = vmatpush1.bf16.msra.mxu0 0
    %73 = vmatprep.subr.bf16.mxu0 0
    %74 = vmatpush1.bf16.msra.mxu0 0
    %75 = vmatprep.subr.bf16.mxu0 0
    %76 = vmatpush1.bf16.msra.mxu0 0
    %77 = vmatprep.subr.bf16.mxu0 0
    %78 = vmatpush1.bf16.msra.mxu0 0
    %79 = vmatprep.mubr.bf16.mxu0 0
    %80 = vmatmul.mubr.bf16.gmra.mrb[0].mxu0 %v45
    %v81 = vpop.f32.mrb[0].mxu0
    %v82 = vadd.f32 0.0, %v81
    %v83 = vpop.f32.mrb[0].mxu0
    %v84 = vpop.f32.mrb[0].mxu0
    %v85 = vpop.f32.mrb[0].mxu0
    %86 = vdwg.mxu0
    %v88 = vrot.slane %v82, 1
    %v91 = vadd.f32 %v24, %v82
    %v92 = vadd.f32 %v25, %v88
    %v93 = vxor.u32 %v91, 2147483648
    %v94 = vxor.u32 %v92, 2147483648
    %v95 = vmul.f32 %v93, 1.442695
    %v96 = vpow.pop %v95
    %v97 = vmul.f32 %v94, 1.442695
    %v98 = vpow.pop %v97
    %v99 = vadd.f32 %v96, 1.0
    %v100 = vadd.f32 %v98, 1.0
    %v101 = vrcp.pop %v99
    %v102 = vmul.f32 1.0, %v101
    %v103 = vrcp.pop %v100
    %v104 = vmul.f32 1.0, %v103
    %v105 = vtanh.pop %v91
    %v106 = vtanh.pop %v92
    %v108 = vrot.slane %v23, 1
    %109 = vrot.lane.b32.xlu0 %v23, 32
    %v110 = vpop.permute.xlu0 %109
    %111 = vrot.lane.b32.xlu0 %v108, 32
    %v112 = vpop.permute.xlu0 %111
    %v115 = vmul.f32 %v102, %v110
    %v116 = vmul.f32 %v104, %v112
    %119 = vrot.lane.b32.xlu0 %v105, 32
    %v120 = vpop.permute.xlu0 %119
    %121 = vrot.lane.b32.xlu0 %v106, 32
    %v122 = vpop.permute.xlu0 %121
    %v125 = vmul.f32 %v102, %v120
    %v126 = vmul.f32 %v104, %v122
    %129 = vrot.lane.b32.xlu0 %v125, 32
    %v130 = vpop.permute.xlu0 %129
    %131 = vrot.lane.b32.xlu0 %v126, 32
    %v132 = vpop.permute.xlu0 %131
    %v135 = vadd.f32 %v115, %v130
    %v136 = vadd.f32 %v116, %v132
    %v137 = vtanh.pop %v135
    %v138 = vtanh.pop %v136
    %141 = vrot.lane.b32.xlu0 %v137, 32
    %v142 = vpop.permute.xlu0 %141
    %143 = vrot.lane.b32.xlu0 %v138, 32
    %v144 = vpop.permute.xlu0 %143
    %v147 = vmul.f32 %v102, %v142
    %v148 = vmul.f32 %v104, %v144
    %151 = vrot.lane.b32.xlu0 %v147, 64
    %v152 = vpop.permute.xlu0 %151
    %153 = vrot.lane.b32.xlu0 %v148, 64
    %v154 = vpop.permute.xlu0 %153
    %vm157 = vcmask 253952
    %158 = vst.msk [vmem:[%s2] sm:$0x1] %vm157, %v152
    %159 = vst.msk [vmem:[%s2 + $0x8] sm:$0x1] %vm157, %v154
    %v160 = vld [vmem:[%s0 + $0x1] sm:$0x1]
    %v161 = vld [vmem:[%s0 + $0x9] sm:$0x1]
    %v162 = vpack.c.bf16 %v147, %v147
    %v163 = vpack.c.bf16 %v148, %v148
    %v164 = vld [vmem:[%s1] sm:$0xf]
    %v165 = vld [vmem:[%s1 + $0x4] sm:$0xf]
    %v166 = vld [vmem:[%s1 + $0x8] sm:$0xf]
    %v167 = vld [vmem:[%s1 + $0xc] sm:$0xf]
    %v170 = vunpack.c.l.b16 %v162
    %v171 = vunpack.c.l.b16 %v163
    %v172 = vrot.slane %v171, 7
    %vm173 = vcmask 1041409
    %v174 = vsel %vm173, %v172, %v170
    %v175 = vpack.c.b16 %v174, %v174
    %176 = vrot.lane.b32.xlu0 %v175, 64
    %v177 = vpop.permute.xlu0 %176
    %v182 = vunpack.c.l.b16 %v164
    %v183 = vunpack.c.l.b16 %v165
    %v184 = vunpack.c.l.b16 %v166
    %v185 = vunpack.c.l.b16 %v167
    %v186 = vpack.c.b16 %v183, %v182
    %v187 = vpack.c.b16 %v185, %v184
    %v191 = vsel %vm43, %v177, 0
    %193 = vmatprep.subr.bf16.mxu0 0
    %194 = vmatpush1.bf16.msra.mxu0 %v186
    %195 = vmatprep.subr.bf16.mxu0 0
    %196 = vmatpush1.bf16.msra.mxu0 %v187
    %197 = vmatprep.subr.bf16.mxu0 0
    %198 = vmatpush1.bf16.msra.mxu0 0
    %199 = vmatprep.subr.bf16.mxu0 0
    %200 = vmatpush1.bf16.msra.mxu0 0
    %201 = vmatprep.subr.bf16.mxu0 0
    %202 = vmatpush1.bf16.msra.mxu0 0
    %203 = vmatprep.subr.bf16.mxu0 0
    %204 = vmatpush1.bf16.msra.mxu0 0
    %205 = vmatprep.subr.bf16.mxu0 0
    %206 = vmatpush1.bf16.msra.mxu0 0
    %207 = vmatprep.subr.bf16.mxu0 0
    %208 = vmatpush1.bf16.msra.mxu0 0
    %209 = vmatprep.subr.bf16.mxu0 0
    %210 = vmatpush1.bf16.msra.mxu0 0
    %211 = vmatprep.subr.bf16.mxu0 0
    %212 = vmatpush1.bf16.msra.mxu0 0
    %213 = vmatprep.subr.bf16.mxu0 0
    %214 = vmatpush1.bf16.msra.mxu0 0
    %215 = vmatprep.subr.bf16.mxu0 0
    %216 = vmatpush1.bf16.msra.mxu0 0
    %217 = vmatprep.subr.bf16.mxu0 0
    %218 = vmatpush1.bf16.msra.mxu0 0
    %219 = vmatprep.subr.bf16.mxu0 0
    %220 = vmatpush1.bf16.msra.mxu0 0
    %221 = vmatprep.subr.bf16.mxu0 0
    %222 = vmatpush1.bf16.msra.mxu0 0
    %223 = vmatprep.subr.bf16.mxu0 0
    %224 = vmatpush1.bf16.msra.mxu0 0
    %225 = vmatprep.mubr.bf16.mxu0 0
    %226 = vmatmul.mubr.bf16.gmra.mrb[0].mxu0 %v191
    %v227 = vpop.f32.mrb[0].mxu0
    %v228 = vadd.f32 0.0, %v227
    %v229 = vpop.f32.mrb[0].mxu0
    %v230 = vpop.f32.mrb[0].mxu0
    %v231 = vpop.f32.mrb[0].mxu0
    %232 = vdwg.mxu0
    %v234 = vrot.slane %v228, 1
    %v237 = vadd.f32 %v160, %v228
    %v238 = vadd.f32 %v161, %v234
    %v239 = vxor.u32 %v237, 2147483648
    %v240 = vxor.u32 %v238, 2147483648
    %v241 = vmul.f32 %v239, 1.442695
    %v242 = vpow.pop %v241
    %v243 = vmul.f32 %v240, 1.442695
    %v244 = vpow.pop %v243
    %v245 = vadd.f32 %v242, 1.0
    %v246 = vadd.f32 %v244, 1.0
    %v247 = vrcp.pop %v245
    %v248 = vmul.f32 1.0, %v247
    %v249 = vrcp.pop %v246
    %v250 = vmul.f32 1.0, %v249
    %v251 = vtanh.pop %v237
    %v252 = vtanh.pop %v238
    %v253 = vmul.f32 %v248, %v135
    %v254 = vmul.f32 %v250, %v136
    %257 = vrot.lane.b32.xlu0 %v251, 32
    %v258 = vpop.permute.xlu0 %257
    %259 = vrot.lane.b32.xlu0 %v252, 32
    %v260 = vpop.permute.xlu0 %259
    %v263 = vmul.f32 %v248, %v258
    %v264 = vmul.f32 %v250, %v260
    %267 = vrot.lane.b32.xlu0 %v263, 32
    %v268 = vpop.permute.xlu0 %267
    %269 = vrot.lane.b32.xlu0 %v264, 32
    %v270 = vpop.permute.xlu0 %269
    %v273 = vadd.f32 %v253, %v268
    %v274 = vadd.f32 %v254, %v270
    %v275 = vtanh.pop %v273
    %v276 = vtanh.pop %v274
    %279 = vrot.lane.b32.xlu0 %v275, 32
    %v280 = vpop.permute.xlu0 %279
    %281 = vrot.lane.b32.xlu0 %v276, 32
    %v282 = vpop.permute.xlu0 %281
    %v285 = vmul.f32 %v248, %v280
    %v286 = vmul.f32 %v250, %v282
    %289 = vrot.lane.b32.xlu0 %v285, 64
    %v290 = vpop.permute.xlu0 %289
    %291 = vrot.lane.b32.xlu0 %v286, 64
    %v292 = vpop.permute.xlu0 %291
    %295 = vst.msk [vmem:[%s2 + $0x1] sm:$0x1] %vm157, %v290
    %296 = vst.msk [vmem:[%s2 + $0x9] sm:$0x1] %vm157, %v292
    %v297 = vld [vmem:[%s0 + $0x2] sm:$0x1]
    %v298 = vld [vmem:[%s0 + $0xa] sm:$0x1]
    %v299 = vpack.c.bf16 %v285, %v285
    %v300 = vpack.c.bf16 %v286, %v286
    %v301 = vld [vmem:[%s1] sm:$0xf]
    %v302 = vld [vmem:[%s1 + $0x4] sm:$0xf]
    %v303 = vld [vmem:[%s1 + $0x8] sm:$0xf]
    %v304 = vld [vmem:[%s1 + $0xc] sm:$0xf]
    %v307 = vunpack.c.l.b16 %v299
    %v308 = vunpack.c.l.b16 %v300
    %v309 = vrot.slane %v308, 7
    %v310 = vsel %vm173, %v309, %v307
    %v311 = vpack.c.b16 %v310, %v310
    %312 = vrot.lane.b32.xlu0 %v311, 64
    %v313 = vpop.permute.xlu0 %312
    %v318 = vunpack.c.l.b16 %v301
    %v319 = vunpack.c.l.b16 %v302
    %v320 = vunpack.c.l.b16 %v303
    %v321 = vunpack.c.l.b16 %v304
    %v322 = vpack.c.b16 %v319, %v318
    %v323 = vpack.c.b16 %v321, %v320
    %v327 = vsel %vm43, %v313, 0
    %329 = vmatprep.subr.bf16.mxu0 0
    %330 = vmatpush1.bf16.msra.mxu0 %v322
    %331 = vmatprep.subr.bf16.mxu0 0
    %332 = vmatpush1.bf16.msra.mxu0 %v323
    %333 = vmatprep.subr.bf16.mxu0 0
    %334 = vmatpush1.bf16.msra.mxu0 0
    %335 = vmatprep.subr.bf16.mxu0 0
    %336 = vmatpush1.bf16.msra.mxu0 0
    %337 = vmatprep.subr.bf16.mxu0 0
    %338 = vmatpush1.bf16.msra.mxu0 0
    %339 = vmatprep.subr.bf16.mxu0 0
    %340 = vmatpush1.bf16.msra.mxu0 0
    %341 = vmatprep.subr.bf16.mxu0 0
    %342 = vmatpush1.bf16.msra.mxu0 0
    %343 = vmatprep.subr.bf16.mxu0 0
    %344 = vmatpush1.bf16.msra.mxu0 0
    %345 = vmatprep.subr.bf16.mxu0 0
    %346 = vmatpush1.bf16.msra.mxu0 0
    %347 = vmatprep.subr.bf16.mxu0 0
    %348 = vmatpush1.bf16.msra.mxu0 0
    %349 = vmatprep.subr.bf16.mxu0 0
    %350 = vmatpush1.bf16.msra.mxu0 0
    %351 = vmatprep.subr.bf16.mxu0 0
    %352 = vmatpush1.bf16.msra.mxu0 0
    %353 = vmatprep.subr.bf16.mxu0 0
    %354 = vmatpush1.bf16.msra.mxu0 0
    %355 = vmatprep.subr.bf16.mxu0 0
    %356 = vmatpush1.bf16.msra.mxu0 0
    %357 = vmatprep.subr.bf16.mxu0 0
    %358 = vmatpush1.bf16.msra.mxu0 0
    %359 = vmatprep.subr.bf16.mxu0 0
    %360 = vmatpush1.bf16.msra.mxu0 0
    %361 = vmatprep.mubr.bf16.mxu0 0
    %362 = vmatmul.mubr.bf16.gmra.mrb[0].mxu0 %v327
    %v363 = vpop.f32.mrb[0].mxu0
    %v364 = vadd.f32 0.0, %v363
    %v365 = vpop.f32.mrb[0].mxu0
    %v366 = vpop.f32.mrb[0].mxu0
    %v367 = vpop.f32.mrb[0].mxu0
    %368 = vdwg.mxu0
    %v370 = vrot.slane %v364, 1
    %v373 = vadd.f32 %v297, %v364
    %v374 = vadd.f32 %v298, %v370
    %v375 = vxor.u32 %v373, 2147483648
    %v376 = vxor.u32 %v374, 2147483648
    %v377 = vmul.f32 %v375, 1.442695
    %v378 = vpow.pop %v377
    %v379 = vmul.f32 %v376, 1.442695
    %v380 = vpow.pop %v379
    %v381 = vadd.f32 %v378, 1.0
    %v382 = vadd.f32 %v380, 1.0
    %v383 = vrcp.pop %v381
    %v384 = vmul.f32 1.0, %v383
    %v385 = vrcp.pop %v382
    %v386 = vmul.f32 1.0, %v385
    %v387 = vtanh.pop %v373
    %v388 = vtanh.pop %v374
    %v389 = vmul.f32 %v384, %v273
    %v390 = vmul.f32 %v386, %v274
    %393 = vrot.lane.b32.xlu0 %v387, 32
    %v394 = vpop.permute.xlu0 %393
    %395 = vrot.lane.b32.xlu0 %v388, 32
    %v396 = vpop.permute.xlu0 %395
    %v399 = vmul.f32 %v384, %v394
    %v400 = vmul.f32 %v386, %v396
    %403 = vrot.lane.b32.xlu0 %v399, 32
    %v404 = vpop.permute.xlu0 %403
    %405 = vrot.lane.b32.xlu0 %v400, 32
    %v406 = vpop.permute.xlu0 %405
    %v409 = vadd.f32 %v389, %v404
    %v410 = vadd.f32 %v390, %v406
    %v411 = vtanh.pop %v409
    %v412 = vtanh.pop %v410
    %415 = vrot.lane.b32.xlu0 %v411, 32
    %v416 = vpop.permute.xlu0 %415
    %417 = vrot.lane.b32.xlu0 %v412, 32
    %v418 = vpop.permute.xlu0 %417
    %v421 = vmul.f32 %v384, %v416
    %v422 = vmul.f32 %v386, %v418
    %425 = vrot.lane.b32.xlu0 %v421, 64
    %v426 = vpop.permute.xlu0 %425
    %427 = vrot.lane.b32.xlu0 %v422, 64
    %v428 = vpop.permute.xlu0 %427
    %431 = vst.msk [vmem:[%s2 + $0x2] sm:$0x1] %vm157, %v426
    %432 = vst.msk [vmem:[%s2 + $0xa] sm:$0x1] %vm157, %v428
    %v433 = vld [vmem:[%s0 + $0x3] sm:$0x1]
    %v434 = vld [vmem:[%s0 + $0xb] sm:$0x1]
    %v435 = vpack.c.bf16 %v421, %v421
    %v436 = vpack.c.bf16 %v422, %v422
    %v437 = vld [vmem:[%s1] sm:$0xf]
    %v438 = vld [vmem:[%s1 + $0x4] sm:$0xf]
    %v439 = vld [vmem:[%s1 + $0x8] sm:$0xf]
    %v440 = vld [vmem:[%s1 + $0xc] sm:$0xf]
    %v443 = vunpack.c.l.b16 %v435
    %v444 = vunpack.c.l.b16 %v436
    %v445 = vrot.slane %v444, 7
    %v446 = vsel %vm173, %v445, %v443
    %v447 = vpack.c.b16 %v446, %v446
    %448 = vrot.lane.b32.xlu0 %v447, 64
    %v449 = vpop.permute.xlu0 %448
    %v454 = vunpack.c.l.b16 %v437
    %v455 = vunpack.c.l.b16 %v438
    %v456 = vunpack.c.l.b16 %v439
    %v457 = vunpack.c.l.b16 %v440
    %v458 = vpack.c.b16 %v455, %v454
    %v459 = vpack.c.b16 %v457, %v456
    %v463 = vsel %vm43, %v449, 0
    %465 = vmatprep.subr.bf16.mxu0 0
    %466 = vmatpush1.bf16.msra.mxu0 %v458
    %467 = vmatprep.subr.bf16.mxu0 0
    %468 = vmatpush1.bf16.msra.mxu0 %v459
    %469 = vmatprep.subr.bf16.mxu0 0
    %470 = vmatpush1.bf16.msra.mxu0 0
    %471 = vmatprep.subr.bf16.mxu0 0
    %472 = vmatpush1.bf16.msra.mxu0 0
    %473 = vmatprep.subr.bf16.mxu0 0
    %474 = vmatpush1.bf16.msra.mxu0 0
    %475 = vmatprep.subr.bf16.mxu0 0
    %476 = vmatpush1.bf16.msra.mxu0 0
    %477 = vmatprep.subr.bf16.mxu0 0
    %478 = vmatpush1.bf16.msra.mxu0 0
    %479 = vmatprep.subr.bf16.mxu0 0
    %480 = vmatpush1.bf16.msra.mxu0 0
    %481 = vmatprep.subr.bf16.mxu0 0
    %482 = vmatpush1.bf16.msra.mxu0 0
    %483 = vmatprep.subr.bf16.mxu0 0
    %484 = vmatpush1.bf16.msra.mxu0 0
    %485 = vmatprep.subr.bf16.mxu0 0
    %486 = vmatpush1.bf16.msra.mxu0 0
    %487 = vmatprep.subr.bf16.mxu0 0
    %488 = vmatpush1.bf16.msra.mxu0 0
    %489 = vmatprep.subr.bf16.mxu0 0
    %490 = vmatpush1.bf16.msra.mxu0 0
    %491 = vmatprep.subr.bf16.mxu0 0
    %492 = vmatpush1.bf16.msra.mxu0 0
    %493 = vmatprep.subr.bf16.mxu0 0
    %494 = vmatpush1.bf16.msra.mxu0 0
    %495 = vmatprep.subr.bf16.mxu0 0
    %496 = vmatpush1.bf16.msra.mxu0 0
    %497 = vmatprep.mubr.bf16.mxu0 0
    %498 = vmatmul.mubr.bf16.gmra.mrb[0].mxu0 %v463
    %v499 = vpop.f32.mrb[0].mxu0
    %v500 = vadd.f32 0.0, %v499
    %v501 = vpop.f32.mrb[0].mxu0
    %v502 = vpop.f32.mrb[0].mxu0
    %v503 = vpop.f32.mrb[0].mxu0
    %504 = vdwg.mxu0
    %v506 = vrot.slane %v500, 1
    %v509 = vadd.f32 %v433, %v500
    %v510 = vadd.f32 %v434, %v506
    %v511 = vxor.u32 %v509, 2147483648
    %v512 = vxor.u32 %v510, 2147483648
    %v513 = vmul.f32 %v511, 1.442695
    %v514 = vpow.pop %v513
    %v515 = vmul.f32 %v512, 1.442695
    %v516 = vpow.pop %v515
    %v517 = vadd.f32 %v514, 1.0
    %v518 = vadd.f32 %v516, 1.0
    %v519 = vrcp.pop %v517
    %v520 = vmul.f32 1.0, %v519
    %v521 = vrcp.pop %v518
    %v522 = vmul.f32 1.0, %v521
    %v523 = vtanh.pop %v509
    %v524 = vtanh.pop %v510
    %v525 = vmul.f32 %v520, %v409
    %v526 = vmul.f32 %v522, %v410
    %529 = vrot.lane.b32.xlu0 %v523, 32
    %v530 = vpop.permute.xlu0 %529
    %531 = vrot.lane.b32.xlu0 %v524, 32
    %v532 = vpop.permute.xlu0 %531
    %v535 = vmul.f32 %v520, %v530
    %v536 = vmul.f32 %v522, %v532
    %539 = vrot.lane.b32.xlu0 %v535, 32
    %v540 = vpop.permute.xlu0 %539
    %541 = vrot.lane.b32.xlu0 %v536, 32
    %v542 = vpop.permute.xlu0 %541
    %v545 = vadd.f32 %v525, %v540
    %v546 = vadd.f32 %v526, %v542
    %v547 = vtanh.pop %v545
    %v548 = vtanh.pop %v546
    %551 = vrot.lane.b32.xlu0 %v547, 32
    %v552 = vpop.permute.xlu0 %551
    %553 = vrot.lane.b32.xlu0 %v548, 32
    %v554 = vpop.permute.xlu0 %553
    %v557 = vmul.f32 %v520, %v552
    %v558 = vmul.f32 %v522, %v554
    %561 = vrot.lane.b32.xlu0 %v557, 64
    %v562 = vpop.permute.xlu0 %561
    %563 = vrot.lane.b32.xlu0 %v558, 64
    %v564 = vpop.permute.xlu0 %563
    %567 = vst.msk [vmem:[%s2 + $0x3] sm:$0x1] %vm157, %v562
    %568 = vst.msk [vmem:[%s2 + $0xb] sm:$0x1] %vm157, %v564
    %v569 = vld [vmem:[%s0 + $0x4] sm:$0x1]
    %v570 = vld [vmem:[%s0 + $0xc] sm:$0x1]
    %v571 = vpack.c.bf16 %v557, %v557
    %v572 = vpack.c.bf16 %v558, %v558
    %v573 = vld [vmem:[%s1] sm:$0xf]
    %v574 = vld [vmem:[%s1 + $0x4] sm:$0xf]
    %v575 = vld [vmem:[%s1 + $0x8] sm:$0xf]
    %v576 = vld [vmem:[%s1 + $0xc] sm:$0xf]
    %v579 = vunpack.c.l.b16 %v571
    %v580 = vunpack.c.l.b16 %v572
    %v581 = vrot.slane %v580, 7
    %v582 = vsel %vm173, %v581, %v579
    %v583 = vpack.c.b16 %v582, %v582
    %584 = vrot.lane.b32.xlu0 %v583, 64
    %v585 = vpop.permute.xlu0 %584
    %v590 = vunpack.c.l.b16 %v573
    %v591 = vunpack.c.l.b16 %v574
    %v592 = vunpack.c.l.b16 %v575
    %v593 = vunpack.c.l.b16 %v576
    %v594 = vpack.c.b16 %v591, %v590
    %v595 = vpack.c.b16 %v593, %v592
    %v599 = vsel %vm43, %v585, 0
    %601 = vmatprep.subr.bf16.mxu0 0
    %602 = vmatpush1.bf16.msra.mxu0 %v594
    %603 = vmatprep.subr.bf16.mxu0 0
    %604 = vmatpush1.bf16.msra.mxu0 %v595
    %605 = vmatprep.subr.bf16.mxu0 0
    %606 = vmatpush1.bf16.msra.mxu0 0
    %607 = vmatprep.subr.bf16.mxu0 0
    %608 = vmatpush1.bf16.msra.mxu0 0
    %609 = vmatprep.subr.bf16.mxu0 0
    %610 = vmatpush1.bf16.msra.mxu0 0
    %611 = vmatprep.subr.bf16.mxu0 0
    %612 = vmatpush1.bf16.msra.mxu0 0
    %613 = vmatprep.subr.bf16.mxu0 0
    %614 = vmatpush1.bf16.msra.mxu0 0
    %615 = vmatprep.subr.bf16.mxu0 0
    %616 = vmatpush1.bf16.msra.mxu0 0
    %617 = vmatprep.subr.bf16.mxu0 0
    %618 = vmatpush1.bf16.msra.mxu0 0
    %619 = vmatprep.subr.bf16.mxu0 0
    %620 = vmatpush1.bf16.msra.mxu0 0
    %621 = vmatprep.subr.bf16.mxu0 0
    %622 = vmatpush1.bf16.msra.mxu0 0
    %623 = vmatprep.subr.bf16.mxu0 0
    %624 = vmatpush1.bf16.msra.mxu0 0
    %625 = vmatprep.subr.bf16.mxu0 0
    %626 = vmatpush1.bf16.msra.mxu0 0
    %627 = vmatprep.subr.bf16.mxu0 0
    %628 = vmatpush1.bf16.msra.mxu0 0
    %629 = vmatprep.subr.bf16.mxu0 0
    %630 = vmatpush1.bf16.msra.mxu0 0
    %631 = vmatprep.subr.bf16.mxu0 0
    %632 = vmatpush1.bf16.msra.mxu0 0
    %633 = vmatprep.mubr.bf16.mxu0 0
    %634 = vmatmul.mubr.bf16.gmra.mrb[0].mxu0 %v599
    %v635 = vpop.f32.mrb[0].mxu0
    %v636 = vadd.f32 0.0, %v635
    %v637 = vpop.f32.mrb[0].mxu0
    %v638 = vpop.f32.mrb[0].mxu0
    %v639 = vpop.f32.mrb[0].mxu0
    %640 = vdwg.mxu0
    %v642 = vrot.slane %v636, 1
    %v645 = vadd.f32 %v569, %v636
    %v646 = vadd.f32 %v570, %v642
    %v647 = vxor.u32 %v645, 2147483648
    %v648 = vxor.u32 %v646, 2147483648
    %v649 = vmul.f32 %v647, 1.442695
    %v650 = vpow.pop %v649
    %v651 = vmul.f32 %v648, 1.442695
    %v652 = vpow.pop %v651
    %v653 = vadd.f32 %v650, 1.0
    %v654 = vadd.f32 %v652, 1.0
    %v655 = vrcp.pop %v653
    %v656 = vmul.f32 1.0, %v655
    %v657 = vrcp.pop %v654
    %v658 = vmul.f32 1.0, %v657
    %v659 = vtanh.pop %v645
    %v660 = vtanh.pop %v646
    %v661 = vmul.f32 %v656, %v545
    %v662 = vmul.f32 %v658, %v546
    %665 = vrot.lane.b32.xlu0 %v659, 32
    %v666 = vpop.permute.xlu0 %665
    %667 = vrot.lane.b32.xlu0 %v660, 32
    %v668 = vpop.permute.xlu0 %667
    %v671 = vmul.f32 %v656, %v666
    %v672 = vmul.f32 %v658, %v668
    %675 = vrot.lane.b32.xlu0 %v671, 32
    %v676 = vpop.permute.xlu0 %675
    %677 = vrot.lane.b32.xlu0 %v672, 32
    %v678 = vpop.permute.xlu0 %677
    %v681 = vadd.f32 %v661, %v676
    %v682 = vadd.f32 %v662, %v678
    %v683 = vtanh.pop %v681
    %v684 = vtanh.pop %v682
    %687 = vrot.lane.b32.xlu0 %v683, 32
    %v688 = vpop.permute.xlu0 %687
    %689 = vrot.lane.b32.xlu0 %v684, 32
    %v690 = vpop.permute.xlu0 %689
    %v693 = vmul.f32 %v656, %v688
    %v694 = vmul.f32 %v658, %v690
    %697 = vrot.lane.b32.xlu0 %v693, 64
    %v698 = vpop.permute.xlu0 %697
    %699 = vrot.lane.b32.xlu0 %v694, 64
    %v700 = vpop.permute.xlu0 %699
    %703 = vst.msk [vmem:[%s2 + $0x4] sm:$0x1] %vm157, %v698
    %704 = vst.msk [vmem:[%s2 + $0xc] sm:$0x1] %vm157, %v700
    %v705 = vld [vmem:[%s0 + $0x5] sm:$0x1]
    %v706 = vld [vmem:[%s0 + $0xd] sm:$0x1]
    %v707 = vpack.c.bf16 %v693, %v693
    %v708 = vpack.c.bf16 %v694, %v694
    %v709 = vld [vmem:[%s1] sm:$0xf]
    %v710 = vld [vmem:[%s1 + $0x4] sm:$0xf]
    %v711 = vld [vmem:[%s1 + $0x8] sm:$0xf]
    %v712 = vld [vmem:[%s1 + $0xc] sm:$0xf]
    %v715 = vunpack.c.l.b16 %v707
    %v716 = vunpack.c.l.b16 %v708
    %v717 = vrot.slane %v716, 7
    %v718 = vsel %vm173, %v717, %v715
    %v719 = vpack.c.b16 %v718, %v718
    %720 = vrot.lane.b32.xlu0 %v719, 64
    %v721 = vpop.permute.xlu0 %720
    %v726 = vunpack.c.l.b16 %v709
    %v727 = vunpack.c.l.b16 %v710
    %v728 = vunpack.c.l.b16 %v711
    %v729 = vunpack.c.l.b16 %v712
    %v730 = vpack.c.b16 %v727, %v726
    %v731 = vpack.c.b16 %v729, %v728
    %v735 = vsel %vm43, %v721, 0
    %737 = vmatprep.subr.bf16.mxu0 0
    %738 = vmatpush1.bf16.msra.mxu0 %v730
    %739 = vmatprep.subr.bf16.mxu0 0
    %740 = vmatpush1.bf16.msra.mxu0 %v731
    %741 = vmatprep.subr.bf16.mxu0 0
    %742 = vmatpush1.bf16.msra.mxu0 0
    %743 = vmatprep.subr.bf16.mxu0 0
    %744 = vmatpush1.bf16.msra.mxu0 0
    %745 = vmatprep.subr.bf16.mxu0 0
    %746 = vmatpush1.bf16.msra.mxu0 0
    %747 = vmatprep.subr.bf16.mxu0 0
    %748 = vmatpush1.bf16.msra.mxu0 0
    %749 = vmatprep.subr.bf16.mxu0 0
    %750 = vmatpush1.bf16.msra.mxu0 0
    %751 = vmatprep.subr.bf16.mxu0 0
    %752 = vmatpush1.bf16.msra.mxu0 0
    %753 = vmatprep.subr.bf16.mxu0 0
    %754 = vmatpush1.bf16.msra.mxu0 0
    %755 = vmatprep.subr.bf16.mxu0 0
    %756 = vmatpush1.bf16.msra.mxu0 0
    %757 = vmatprep.subr.bf16.mxu0 0
    %758 = vmatpush1.bf16.msra.mxu0 0
    %759 = vmatprep.subr.bf16.mxu0 0
    %760 = vmatpush1.bf16.msra.mxu0 0
    %761 = vmatprep.subr.bf16.mxu0 0
    %762 = vmatpush1.bf16.msra.mxu0 0
    %763 = vmatprep.subr.bf16.mxu0 0
    %764 = vmatpush1.bf16.msra.mxu0 0
    %765 = vmatprep.subr.bf16.mxu0 0
    %766 = vmatpush1.bf16.msra.mxu0 0
    %767 = vmatprep.subr.bf16.mxu0 0
    %768 = vmatpush1.bf16.msra.mxu0 0
    %769 = vmatprep.mubr.bf16.mxu0 0
    %770 = vmatmul.mubr.bf16.gmra.mrb[0].mxu0 %v735
    %v771 = vpop.f32.mrb[0].mxu0
    %v772 = vadd.f32 0.0, %v771
    %v773 = vpop.f32.mrb[0].mxu0
    %v774 = vpop.f32.mrb[0].mxu0
    %v775 = vpop.f32.mrb[0].mxu0
    %776 = vdwg.mxu0
    %v778 = vrot.slane %v772, 1
    %v781 = vadd.f32 %v705, %v772
    %v782 = vadd.f32 %v706, %v778
    %v783 = vxor.u32 %v781, 2147483648
    %v784 = vxor.u32 %v782, 2147483648
    %v785 = vmul.f32 %v783, 1.442695
    %v786 = vpow.pop %v785
    %v787 = vmul.f32 %v784, 1.442695
    %v788 = vpow.pop %v787
    %v789 = vadd.f32 %v786, 1.0
    %v790 = vadd.f32 %v788, 1.0
    %v791 = vrcp.pop %v789
    %v792 = vmul.f32 1.0, %v791
    %v793 = vrcp.pop %v790
    %v794 = vmul.f32 1.0, %v793
    %v795 = vtanh.pop %v781
    %v796 = vtanh.pop %v782
    %v797 = vmul.f32 %v792, %v681
    %v798 = vmul.f32 %v794, %v682
    %801 = vrot.lane.b32.xlu0 %v795, 32
    %v802 = vpop.permute.xlu0 %801
    %803 = vrot.lane.b32.xlu0 %v796, 32
    %v804 = vpop.permute.xlu0 %803
    %v807 = vmul.f32 %v792, %v802
    %v808 = vmul.f32 %v794, %v804
    %811 = vrot.lane.b32.xlu0 %v807, 32
    %v812 = vpop.permute.xlu0 %811
    %813 = vrot.lane.b32.xlu0 %v808, 32
    %v814 = vpop.permute.xlu0 %813
    %v817 = vadd.f32 %v797, %v812
    %v818 = vadd.f32 %v798, %v814
    %v819 = vtanh.pop %v817
    %v820 = vtanh.pop %v818
    %823 = vrot.lane.b32.xlu0 %v819, 32
    %v824 = vpop.permute.xlu0 %823
    %825 = vrot.lane.b32.xlu0 %v820, 32
    %v826 = vpop.permute.xlu0 %825
    %v829 = vmul.f32 %v792, %v824
    %v830 = vmul.f32 %v794, %v826
    %833 = vrot.lane.b32.xlu0 %v829, 64
    %v834 = vpop.permute.xlu0 %833
    %835 = vrot.lane.b32.xlu0 %v830, 64
    %v836 = vpop.permute.xlu0 %835
    %839 = vst.msk [vmem:[%s2 + $0x5] sm:$0x1] %vm157, %v834
    %840 = vst.msk [vmem:[%s2 + $0xd] sm:$0x1] %vm157, %v836
    %v841 = vld [vmem:[%s0 + $0x6] sm:$0x1]
    %v842 = vld [vmem:[%s0 + $0xe] sm:$0x1]
    %v843 = vpack.c.bf16 %v829, %v829
    %v844 = vpack.c.bf16 %v830, %v830
    %v845 = vld [vmem:[%s1] sm:$0xf]
    %v846 = vld [vmem:[%s1 + $0x4] sm:$0xf]
    %v847 = vld [vmem:[%s1 + $0x8] sm:$0xf]
    %v848 = vld [vmem:[%s1 + $0xc] sm:$0xf]
    %v851 = vunpack.c.l.b16 %v843
    %v852 = vunpack.c.l.b16 %v844
    %v853 = vrot.slane %v852, 7
    %v854 = vsel %vm173, %v853, %v851
    %v855 = vpack.c.b16 %v854, %v854
    %856 = vrot.lane.b32.xlu0 %v855, 64
    %v857 = vpop.permute.xlu0 %856
    %v862 = vunpack.c.l.b16 %v845
    %v863 = vunpack.c.l.b16 %v846
    %v864 = vunpack.c.l.b16 %v847
    %v865 = vunpack.c.l.b16 %v848
    %v866 = vpack.c.b16 %v863, %v862
    %v867 = vpack.c.b16 %v865, %v864
    %v871 = vsel %vm43, %v857, 0
    %873 = vmatprep.subr.bf16.mxu0 0
    %874 = vmatpush1.bf16.msra.mxu0 %v866
    %875 = vmatprep.subr.bf16.mxu0 0
    %876 = vmatpush1.bf16.msra.mxu0 %v867
    %877 = vmatprep.subr.bf16.mxu0 0
    %878 = vmatpush1.bf16.msra.mxu0 0
    %879 = vmatprep.subr.bf16.mxu0 0
    %880 = vmatpush1.bf16.msra.mxu0 0
    %881 = vmatprep.subr.bf16.mxu0 0
    %882 = vmatpush1.bf16.msra.mxu0 0
    %883 = vmatprep.subr.bf16.mxu0 0
    %884 = vmatpush1.bf16.msra.mxu0 0
    %885 = vmatprep.subr.bf16.mxu0 0
    %886 = vmatpush1.bf16.msra.mxu0 0
    %887 = vmatprep.subr.bf16.mxu0 0
    %888 = vmatpush1.bf16.msra.mxu0 0
    %889 = vmatprep.subr.bf16.mxu0 0
    %890 = vmatpush1.bf16.msra.mxu0 0
    %891 = vmatprep.subr.bf16.mxu0 0
    %892 = vmatpush1.bf16.msra.mxu0 0
    %893 = vmatprep.subr.bf16.mxu0 0
    %894 = vmatpush1.bf16.msra.mxu0 0
    %895 = vmatprep.subr.bf16.mxu0 0
    %896 = vmatpush1.bf16.msra.mxu0 0
    %897 = vmatprep.subr.bf16.mxu0 0
    %898 = vmatpush1.bf16.msra.mxu0 0
    %899 = vmatprep.subr.bf16.mxu0 0
    %900 = vmatpush1.bf16.msra.mxu0 0
    %901 = vmatprep.subr.bf16.mxu0 0
    %902 = vmatpush1.bf16.msra.mxu0 0
    %903 = vmatprep.subr.bf16.mxu0 0
    %904 = vmatpush1.bf16.msra.mxu0 0
    %905 = vmatprep.mubr.bf16.mxu0 0
    %906 = vmatmul.mubr.bf16.gmra.mrb[0].mxu0 %v871
    %v907 = vpop.f32.mrb[0].mxu0
    %v908 = vadd.f32 0.0, %v907
    %v909 = vpop.f32.mrb[0].mxu0
    %v910 = vpop.f32.mrb[0].mxu0
    %v911 = vpop.f32.mrb[0].mxu0
    %912 = vdwg.mxu0
    %v914 = vrot.slane %v908, 1
    %v917 = vadd.f32 %v841, %v908
    %v918 = vadd.f32 %v842, %v914
    %v919 = vxor.u32 %v917, 2147483648
    %v920 = vxor.u32 %v918, 2147483648
    %v921 = vmul.f32 %v919, 1.442695
    %v922 = vpow.pop %v921
    %v923 = vmul.f32 %v920, 1.442695
    %v924 = vpow.pop %v923
    %v925 = vadd.f32 %v922, 1.0
    %v926 = vadd.f32 %v924, 1.0
    %v927 = vrcp.pop %v925
    %v928 = vmul.f32 1.0, %v927
    %v929 = vrcp.pop %v926
    %v930 = vmul.f32 1.0, %v929
    %v931 = vtanh.pop %v917
    %v932 = vtanh.pop %v918
    %v933 = vmul.f32 %v928, %v817
    %v934 = vmul.f32 %v930, %v818
    %937 = vrot.lane.b32.xlu0 %v931, 32
    %v938 = vpop.permute.xlu0 %937
    %939 = vrot.lane.b32.xlu0 %v932, 32
    %v940 = vpop.permute.xlu0 %939
    %v943 = vmul.f32 %v928, %v938
    %v944 = vmul.f32 %v930, %v940
    %947 = vrot.lane.b32.xlu0 %v943, 32
    %v948 = vpop.permute.xlu0 %947
    %949 = vrot.lane.b32.xlu0 %v944, 32
    %v950 = vpop.permute.xlu0 %949
    %v953 = vadd.f32 %v933, %v948
    %v954 = vadd.f32 %v934, %v950
    %v955 = vtanh.pop %v953
    %v956 = vtanh.pop %v954
    %959 = vrot.lane.b32.xlu0 %v955, 32
    %v960 = vpop.permute.xlu0 %959
    %961 = vrot.lane.b32.xlu0 %v956, 32
    %v962 = vpop.permute.xlu0 %961
    %v965 = vmul.f32 %v928, %v960
    %v966 = vmul.f32 %v930, %v962
    %969 = vrot.lane.b32.xlu0 %v965, 64
    %v970 = vpop.permute.xlu0 %969
    %971 = vrot.lane.b32.xlu0 %v966, 64
    %v972 = vpop.permute.xlu0 %971
    %975 = vst.msk [vmem:[%s2 + $0x6] sm:$0x1] %vm157, %v970
    %976 = vst.msk [vmem:[%s2 + $0xe] sm:$0x1] %vm157, %v972
    %v977 = vld [vmem:[%s0 + $0x7] sm:$0x1]
    %v978 = vld [vmem:[%s0 + $0xf] sm:$0x1]
    %v979 = vpack.c.bf16 %v965, %v965
    %v980 = vpack.c.bf16 %v966, %v966
    %v981 = vld [vmem:[%s1] sm:$0xf]
    %v982 = vld [vmem:[%s1 + $0x4] sm:$0xf]
    %v983 = vld [vmem:[%s1 + $0x8] sm:$0xf]
    %v984 = vld [vmem:[%s1 + $0xc] sm:$0xf]
    %v987 = vunpack.c.l.b16 %v979
    %v988 = vunpack.c.l.b16 %v980
    %v989 = vrot.slane %v988, 7
    %v990 = vsel %vm173, %v989, %v987
    %v991 = vpack.c.b16 %v990, %v990
    %992 = vrot.lane.b32.xlu0 %v991, 64
    %v993 = vpop.permute.xlu0 %992
    %v998 = vunpack.c.l.b16 %v981
    %v999 = vunpack.c.l.b16 %v982
    %v1000 = vunpack.c.l.b16 %v983
    %v1001 = vunpack.c.l.b16 %v984
    %v1002 = vpack.c.b16 %v999, %v998
    %v1003 = vpack.c.b16 %v1001, %v1000
    %v1007 = vsel %vm43, %v993, 0
    %1009 = vmatprep.subr.bf16.mxu0 0
    %1010 = vmatpush1.bf16.msra.mxu0 %v1002
    %1011 = vmatprep.subr.bf16.mxu0 0
    %1012 = vmatpush1.bf16.msra.mxu0 %v1003
    %1013 = vmatprep.subr.bf16.mxu0 0
    %1014 = vmatpush1.bf16.msra.mxu0 0
    %1015 = vmatprep.subr.bf16.mxu0 0
    %1016 = vmatpush1.bf16.msra.mxu0 0
    %1017 = vmatprep.subr.bf16.mxu0 0
    %1018 = vmatpush1.bf16.msra.mxu0 0
    %1019 = vmatprep.subr.bf16.mxu0 0
    %1020 = vmatpush1.bf16.msra.mxu0 0
    %1021 = vmatprep.subr.bf16.mxu0 0
    %1022 = vmatpush1.bf16.msra.mxu0 0
    %1023 = vmatprep.subr.bf16.mxu0 0
    %1024 = vmatpush1.bf16.msra.mxu0 0
    %1025 = vmatprep.subr.bf16.mxu0 0
    %1026 = vmatpush1.bf16.msra.mxu0 0
    %1027 = vmatprep.subr.bf16.mxu0 0
    %1028 = vmatpush1.bf16.msra.mxu0 0
    %1029 = vmatprep.subr.bf16.mxu0 0
    %1030 = vmatpush1.bf16.msra.mxu0 0
    %1031 = vmatprep.subr.bf16.mxu0 0
    %1032 = vmatpush1.bf16.msra.mxu0 0
    %1033 = vmatprep.subr.bf16.mxu0 0
    %1034 = vmatpush1.bf16.msra.mxu0 0
    %1035 = vmatprep.subr.bf16.mxu0 0
    %1036 = vmatpush1.bf16.msra.mxu0 0
    %1037 = vmatprep.subr.bf16.mxu0 0
    %1038 = vmatpush1.bf16.msra.mxu0 0
    %1039 = vmatprep.subr.bf16.mxu0 0
    %1040 = vmatpush1.bf16.msra.mxu0 0
    %1041 = vmatprep.mubr.bf16.mxu0 0
    %1042 = vmatmul.mubr.bf16.gmra.mrb[0].mxu0 %v1007
    %v1043 = vpop.f32.mrb[0].mxu0
    %v1044 = vadd.f32 0.0, %v1043
    %v1045 = vpop.f32.mrb[0].mxu0
    %v1046 = vpop.f32.mrb[0].mxu0
    %v1047 = vpop.f32.mrb[0].mxu0
    %1048 = vdwg.mxu0
    %v1050 = vrot.slane %v1044, 1
    %v1053 = vadd.f32 %v977, %v1044
    %v1054 = vadd.f32 %v978, %v1050
    %v1055 = vxor.u32 %v1053, 2147483648
    %v1056 = vxor.u32 %v1054, 2147483648
    %v1057 = vmul.f32 %v1055, 1.442695
    %v1058 = vpow.pop %v1057
    %v1059 = vmul.f32 %v1056, 1.442695
    %v1060 = vpow.pop %v1059
    %v1061 = vadd.f32 %v1058, 1.0
    %v1062 = vadd.f32 %v1060, 1.0
    %v1063 = vrcp.pop %v1061
    %v1064 = vmul.f32 1.0, %v1063
    %v1065 = vrcp.pop %v1062
    %v1066 = vmul.f32 1.0, %v1065
    %v1067 = vtanh.pop %v1053
    %v1068 = vtanh.pop %v1054
    %v1069 = vmul.f32 %v1064, %v953
    %v1070 = vmul.f32 %v1066, %v954
    %1073 = vrot.lane.b32.xlu0 %v1067, 32
    %v1074 = vpop.permute.xlu0 %1073
    %1075 = vrot.lane.b32.xlu0 %v1068, 32
    %v1076 = vpop.permute.xlu0 %1075
    %v1079 = vmul.f32 %v1064, %v1074
    %v1080 = vmul.f32 %v1066, %v1076
    %1083 = vrot.lane.b32.xlu0 %v1079, 32
    %v1084 = vpop.permute.xlu0 %1083
    %1085 = vrot.lane.b32.xlu0 %v1080, 32
    %v1086 = vpop.permute.xlu0 %1085
    %v1089 = vadd.f32 %v1069, %v1084
    %v1090 = vadd.f32 %v1070, %v1086
    %v1091 = vtanh.pop %v1089
    %v1092 = vtanh.pop %v1090
    %1095 = vrot.lane.b32.xlu0 %v1091, 32
    %v1096 = vpop.permute.xlu0 %1095
    %1097 = vrot.lane.b32.xlu0 %v1092, 32
    %v1098 = vpop.permute.xlu0 %1097
    %v1101 = vmul.f32 %v1064, %v1096
    %v1102 = vmul.f32 %v1066, %v1098
    %1105 = vrot.lane.b32.xlu0 %v1101, 64
    %v1106 = vpop.permute.xlu0 %1105
    %1107 = vrot.lane.b32.xlu0 %v1102, 64
    %v1108 = vpop.permute.xlu0 %1107
    %1111 = vst.msk [vmem:[%s2 + $0x7] sm:$0x1] %vm157, %v1106
    %1112 = vst.msk [vmem:[%s2 + $0xf] sm:$0x1] %vm157, %v1108
    %v1113 = vrot.slane %v1102, 7
    %v1114 = vsel %vm173, %v1113, %v1101
    %1115 = vrot.lane.b32.xlu0 %v1114, 64
    %v1116 = vpop.permute.xlu0 %1115
    %vm1118 = vcmask 254976
    %1119 = vst.msk [vmem:[#allocation2] sm:$0x3] %vm1118, %v1116
    %v1122 = vrot.slane %v1090, 7
    %v1123 = vsel %vm173, %v1122, %v1089
    %1124 = vrot.lane.b32.xlu0 %v1123, 96
    %v1125 = vpop.permute.xlu0 %1124
    %1127 = vst.msk [vmem:[#allocation3] sm:$0x3] %vm1118, %v1125
    // Predicated region
    $region14: #{encoder_forward.1} parent=1 // pred_check
      %p1128 = pneg %p15
    $region15: #{encoder_forward.1} parent=1 // pred_check_branch
      %1130 = sbr.rel (%p1128) target = $region17
    $region16: #{encoder_forward.1} parent=1 // pred_region
      %1131 = vst.msk [vmem:[#allocation4] sm:$0x3] %vm1118, %v1125
    $region17: #{encoder_forward.1} parent=1 // pred_fallthru
      _
    // Predicated region
    $region18: #{encoder_forward.1} parent=1 // pred_check
      _
    $region19: #{encoder_forward.1} parent=1 // pred_check_branch
      %1133 = sbr.rel (0) target = $region21
    $region20: #{encoder_forward.1} parent=1 // pred_region
      _
    $region21: #{encoder_forward.1} parent=1 // pred_fallthru
      _
    // Predicated region
    $region22: #{encoder_forward.1} parent=1 // pred_check
      _
    $region23: #{encoder_forward.1} parent=1 // pred_check_branch
      %1135 = sbr.rel (0) target = $region25
    $region24: #{encoder_forward.1} parent=1 // pred_region
      %s1137 = ssub.s32 32, 32
      %1138 = vsyncadd [#allocation5], %s1137
      %s1140 = sshll.u32 [#allocation4], 4
      %s1141 = int_to_ptr.vmem [resolvable:$true] %s1140
      %1143 = dma.vmem_to_hbm [thread:$0]  %s1141, 32, %s3, [#allocation5]
    $region25: #{encoder_forward.1} parent=1 // pred_fallthru
      _
    // Predicated region
    $region26: #{encoder_forward.1} parent=1 // pred_check
      _
    $region27: #{encoder_forward.1} parent=1 // pred_check_branch
      %1145 = sbr.rel (0) target = $region29
    $region28: #{encoder_forward.1} parent=1 // pred_region
      _
    $region29: #{encoder_forward.1} parent=1 // pred_fallthru
      _
    // Predicated region
    $region30: #{encoder_forward.1} parent=1 // pred_check
      _
    $region31: #{encoder_forward.1} parent=1 // pred_check_branch
      %1147 = sbr.rel (0) target = $region33
    $region32: #{encoder_forward.1} parent=1 // pred_region
      %1148 = dma.done [#allocation5], 32
    $region33: #{encoder_forward.1} parent=1 // pred_fallthru
      _
    %1149 = vsyncpa [#allocation5], 1

</llo_original>
